<compile_context>
chip_gen: v7x
topology: tpu7x:2x2x1
jax: 0.10.0
libtpu: 0.0.40
codegen_flags: <defaults>
</compile_context>

<pallas_src>
import functools

import jax
import jax.numpy as jnp
from jax import lax
from jax.experimental import pallas as pl
from jax.experimental.pallas import tpu as pltpu  # noqa: F401 (future grid / CompilerParams tuning)


def _mha_kernel(x_ref, w3_ref, wp_ref, b_ref, out_ref, attn_ref, *,
                num_heads, batch, seq):
    # x_ref:    (B*N, C)   tokens, batch-major rows (row = b*N + n)
    # w3_ref:   (C, 3C)    qkv weight, pre-transposed, softmax scale folded into q cols
    # wp_ref:   (C, C)     proj weight, pre-transposed
    # b_ref:    (1, C)     proj bias
    # out_ref:  (B*N, C)
    # attn_ref: (B, H, N, N)
    _, C = x_ref.shape
    B, N, H = batch, seq, num_heads
    hd = C // H
    G = B * H

    w3 = w3_ref[...]                                     # hoisted, lane-dense
    wp = wp_ref[...]
    bias = b_ref[...]                                    # (1, C)

    # ---- QKV: one lane-dense GEMM over all tokens ---------------------------
    qkv = jnp.dot(x_ref[...], w3,
                  preferred_element_type=jnp.float32)    # (B*N, 3C)

    # ---- split heads: static lane slices -> (G, N, hd), g = b*H + h ---------
    q_blk, k_blk, v_blk = [], [], []
    for b in range(B):
        rows = qkv[b * N:(b + 1) * N]                    # (N, 3C)
        for h in range(H):
            lo = h * hd
            q_blk.append(rows[None, :, lo:lo + hd])
            k_blk.append(rows[None, :, C + lo:C + lo + hd])
            v_blk.append(rows[None, :, 2 * C + lo:2 * C + lo + hd])
    q = jnp.concatenate(q_blk, axis=0)                   # (G, N, hd)
    k = jnp.concatenate(k_blk, axis=0)
    v = jnp.concatenate(v_blk, axis=0)

    # ---- scores + causal softmax, batched over G -----------------------------
    s = jnp.einsum('gqd,gkd->gqk', q, k,
                   preferred_element_type=jnp.float32)   # (G, N, N)
    row = lax.broadcasted_iota(jnp.int32, (N, N), 0)
    col = lax.broadcasted_iota(jnp.int32, (N, N), 1)
    # Diagonal is always unmasked, so -inf is NaN-safe here.
    s = s + jnp.where(col <= row, jnp.float32(0.0), jnp.float32(-jnp.inf))

    m = jnp.max(s, axis=-1, keepdims=True)
    e = jnp.exp(s - m)
    p = e * pl.reciprocal(jnp.sum(e, axis=-1, keepdims=True), approx=False)

    attn_ref[...] = p.reshape(B, H, N, N)                # single store (leading-dim reshape only)

    # ---- context + output projection (one GEMM over heads & head_dim) -------
    ctx = jnp.einsum('gqk,gkd->gqd', p, v,
                     preferred_element_type=jnp.float32)  # (G, N, hd)
    # merge heads back to (B*N, C): lane-concat heads, sublane-concat batches
    per_b = [jnp.concatenate([ctx[b * H + h] for h in range(H)], axis=1)   # (N, C)
             for b in range(B)]
    ctx2 = jnp.concatenate(per_b, axis=0)                # (B*N, C)

    out_ref[...] = jnp.dot(ctx2, wp,
                           preferred_element_type=jnp.float32) + bias


def multihead_attention(x_nbc, w_qkv, w_proj, b_proj, *, num_heads, stride):
    """x_nbc: (N, B, C) float32, seq-first (same as the PyTorch module input)."""
    N, B, C = x_nbc.shape
    assert N == stride + 1, "time_mask requires seq_len == stride + 1"
    assert C % num_heads == 0
    hd = C // num_heads
    scale = hd ** (-0.5)

    # One-time, tiny layout prep OUTSIDE the kernel (grid-invariant work):
    #   x flattened to batch-major token rows (B*N, C);
    #   qkv weight as lane-dense (C, 3C) with the softmax scale folded into the
    #   q columns; proj weight as lane-dense (C, C).
    x2 = jnp.transpose(x_nbc.astype(jnp.float32), (1, 0, 2)).reshape(B * N, C)
    w_qkv = w_qkv.astype(jnp.float32)
    w3 = jnp.concatenate([w_qkv[:C].T * jnp.float32(scale), w_qkv[C:].T], axis=1)  # (C, 3C)
    wp = w_proj.astype(jnp.float32).T                                              # (C, C)
    b2 = b_proj.astype(jnp.float32).reshape(1, C)

    kernel = functools.partial(_mha_kernel, num_heads=num_heads, batch=B, seq=N)

    out2, attn = pl.pallas_call(
        kernel,
        out_shape=(jax.ShapeDtypeStruct((B * N, C), jnp.float32),
                   jax.ShapeDtypeStruct((B, num_heads, N, N), jnp.float32)),
    )(x2, w3, wp, b2)

    # back to seq-first (N, B, C), matching `x.permute(1, 0, 2)` in forward()
    out = jnp.transpose(out2.reshape(B, N, C), (1, 0, 2))
    return out, attn


def _reference(x_nbc, w_qkv, w_proj, b_proj, num_heads):
    """Pure-JAX reference mirroring the PyTorch forward."""
    x = jnp.transpose(x_nbc, (1, 0, 2))                            # (B, N, C)
    B, N, C = x.shape
    hd = C // num_heads
    scale = hd ** (-0.5)
    qkv = (x @ w_qkv.T).reshape(B, N, 3, num_heads, hd).transpose(2, 0, 3, 1, 4)
    q, k, v = qkv[0], qkv[1], qkv[2]                               # (B, H, N, hd)
    attn = jnp.einsum('bhnd,bhmd->bhnm', q, k) * scale
    mask = jnp.tril(jnp.ones((N, N), dtype=bool))
    attn = jnp.where(mask, attn, -jnp.inf)
    attn = jax.nn.softmax(attn, axis=-1)
    o = jnp.einsum('bhnm,bhmd->bhnd', attn, v).transpose(0, 2, 1, 3).reshape(B, N, C)
    o = o @ w_proj.T + b_proj
    return jnp.transpose(o, (1, 0, 2)), attn


if __name__ == "__main__":
    # small shapes consistent with the module:
    #   dim = 32, num_heads = 4 (head_dim = 8), stride = 8 -> seq N = 9, batch B = 2
    dim, num_heads, stride = 32, 4, 8
    N, B = stride + 1, 2

    key = jax.random.PRNGKey(0)
    kx, kq, kp, kb = jax.random.split(key, 4)

    x = jax.random.normal(kx, (N, B, dim), dtype=jnp.float32)       # (N, B, C)
    w_qkv = 0.02 * jax.random.normal(kq, (3 * dim, dim), jnp.float32)
    w_proj = 0.02 * jax.random.normal(kp, (dim, dim), jnp.float32)
    b_proj = 0.02 * jax.random.normal(kb, (dim,), jnp.float32)

    out, attn = multihead_attention(x, w_qkv, w_proj, b_proj,
                                    num_heads=num_heads, stride=stride)
    out = jax.block_until_ready(out)
    attn = jax.block_until_ready(attn)

    ref_out, ref_attn = _reference(x, w_qkv, w_proj, b_proj, num_heads)
    assert out.shape == (N, B, dim)
    assert attn.shape == (B, num_heads, N, N)
    assert jnp.allclose(out, ref_out, atol=1e-4, rtol=1e-4)
    assert jnp.allclose(attn, ref_attn, atol=1e-4, rtol=1e-4)

    print("KERNEL_OK")
</pallas_src>

<mosaic_0001>
module attributes {stable_mosaic.version = 11 : i64} {
  func.func @_mha_kernel(%arg0: memref<18x32xf32, #tpu.memory_space<vmem>>, %arg1: memref<32x96xf32, #tpu.memory_space<vmem>>, %arg2: memref<32x32xf32, #tpu.memory_space<vmem>>, %arg3: memref<1x32xf32, #tpu.memory_space<vmem>>, %arg4: memref<18x32xf32, #tpu.memory_space<vmem>>, %arg5: memref<2x4x9x9xf32, #tpu.memory_space<vmem>>) attributes {dimension_semantics = [], scalar_prefetch = 0 : i64, scratch_operands = 0 : i64, tpu.core_type = #tpu.core_type<tc>} {
    %c0 = arith.constant 0 : index
    %c0_0 = arith.constant 0 : index
    %0 = vector.load %arg1[%c0, %c0_0] : memref<32x96xf32, #tpu.memory_space<vmem>>, vector<32x96xf32>
    %c0_1 = arith.constant 0 : index
    %c0_2 = arith.constant 0 : index
    %1 = vector.load %arg2[%c0_1, %c0_2] : memref<32x32xf32, #tpu.memory_space<vmem>>, vector<32x32xf32>
    %c0_3 = arith.constant 0 : index
    %c0_4 = arith.constant 0 : index
    %2 = vector.load %arg3[%c0_3, %c0_4] : memref<1x32xf32, #tpu.memory_space<vmem>>, vector<1x32xf32>
    %c0_5 = arith.constant 0 : index
    %c0_6 = arith.constant 0 : index
    %3 = vector.load %arg0[%c0_5, %c0_6] : memref<18x32xf32, #tpu.memory_space<vmem>>, vector<18x32xf32>
    %cst = arith.constant dense<0.000000e+00> : vector<18x96xf32>
    %4 = tpu.matmul %3, %0, %cst {dimension_numbers = #tpu.dot_dimension_numbers<[1], [0], [0], [1], [0, 0, 1, 1], [], []>} : vector<18x32xf32>, vector<32x96xf32>, vector<18x96xf32> -> vector<18x96xf32>
    %5 = vector.extract_strided_slice %4 {offsets = [0, 0], sizes = [9, 96], strides = [1, 1]} : vector<18x96xf32> to vector<9x96xf32>
    %6 = vector.extract_strided_slice %5 {offsets = [0, 0], sizes = [9, 8], strides = [1, 1]} : vector<9x96xf32> to vector<9x8xf32>
    %7 = vector.shape_cast %6 : vector<9x8xf32> to vector<1x9x8xf32>
    %8 = vector.extract_strided_slice %5 {offsets = [0, 32], sizes = [9, 8], strides = [1, 1]} : vector<9x96xf32> to vector<9x8xf32>
    %9 = vector.shape_cast %8 : vector<9x8xf32> to vector<1x9x8xf32>
    %10 = vector.extract_strided_slice %5 {offsets = [0, 64], sizes = [9, 8], strides = [1, 1]} : vector<9x96xf32> to vector<9x8xf32>
    %11 = vector.shape_cast %10 : vector<9x8xf32> to vector<1x9x8xf32>
    %12 = vector.extract_strided_slice %5 {offsets = [0, 8], sizes = [9, 8], strides = [1, 1]} : vector<9x96xf32> to vector<9x8xf32>
    %13 = vector.shape_cast %12 : vector<9x8xf32> to vector<1x9x8xf32>
    %14 = vector.extract_strided_slice %5 {offsets = [0, 40], sizes = [9, 8], strides = [1, 1]} : vector<9x96xf32> to vector<9x8xf32>
    %15 = vector.shape_cast %14 : vector<9x8xf32> to vector<1x9x8xf32>
    %16 = vector.extract_strided_slice %5 {offsets = [0, 72], sizes = [9, 8], strides = [1, 1]} : vector<9x96xf32> to vector<9x8xf32>
    %17 = vector.shape_cast %16 : vector<9x8xf32> to vector<1x9x8xf32>
    %18 = vector.extract_strided_slice %5 {offsets = [0, 16], sizes = [9, 8], strides = [1, 1]} : vector<9x96xf32> to vector<9x8xf32>
    %19 = vector.shape_cast %18 : vector<9x8xf32> to vector<1x9x8xf32>
    %20 = vector.extract_strided_slice %5 {offsets = [0, 48], sizes = [9, 8], strides = [1, 1]} : vector<9x96xf32> to vector<9x8xf32>
    %21 = vector.shape_cast %20 : vector<9x8xf32> to vector<1x9x8xf32>
    %22 = vector.extract_strided_slice %5 {offsets = [0, 80], sizes = [9, 8], strides = [1, 1]} : vector<9x96xf32> to vector<9x8xf32>
    %23 = vector.shape_cast %22 : vector<9x8xf32> to vector<1x9x8xf32>
    %24 = vector.extract_strided_slice %5 {offsets = [0, 24], sizes = [9, 8], strides = [1, 1]} : vector<9x96xf32> to vector<9x8xf32>
    %25 = vector.shape_cast %24 : vector<9x8xf32> to vector<1x9x8xf32>
    %26 = vector.extract_strided_slice %5 {offsets = [0, 56], sizes = [9, 8], strides = [1, 1]} : vector<9x96xf32> to vector<9x8xf32>
    %27 = vector.shape_cast %26 : vector<9x8xf32> to vector<1x9x8xf32>
    %28 = vector.extract_strided_slice %5 {offsets = [0, 88], sizes = [9, 8], strides = [1, 1]} : vector<9x96xf32> to vector<9x8xf32>
    %29 = vector.shape_cast %28 : vector<9x8xf32> to vector<1x9x8xf32>
    %30 = vector.extract_strided_slice %4 {offsets = [9, 0], sizes = [9, 96], strides = [1, 1]} : vector<18x96xf32> to vector<9x96xf32>
    %31 = vector.extract_strided_slice %30 {offsets = [0, 0], sizes = [9, 8], strides = [1, 1]} : vector<9x96xf32> to vector<9x8xf32>
    %32 = vector.shape_cast %31 : vector<9x8xf32> to vector<1x9x8xf32>
    %33 = vector.extract_strided_slice %30 {offsets = [0, 32], sizes = [9, 8], strides = [1, 1]} : vector<9x96xf32> to vector<9x8xf32>
    %34 = vector.shape_cast %33 : vector<9x8xf32> to vector<1x9x8xf32>
    %35 = vector.extract_strided_slice %30 {offsets = [0, 64], sizes = [9, 8], strides = [1, 1]} : vector<9x96xf32> to vector<9x8xf32>
    %36 = vector.shape_cast %35 : vector<9x8xf32> to vector<1x9x8xf32>
    %37 = vector.extract_strided_slice %30 {offsets = [0, 8], sizes = [9, 8], strides = [1, 1]} : vector<9x96xf32> to vector<9x8xf32>
    %38 = vector.shape_cast %37 : vector<9x8xf32> to vector<1x9x8xf32>
    %39 = vector.extract_strided_slice %30 {offsets = [0, 40], sizes = [9, 8], strides = [1, 1]} : vector<9x96xf32> to vector<9x8xf32>
    %40 = vector.shape_cast %39 : vector<9x8xf32> to vector<1x9x8xf32>
    %41 = vector.extract_strided_slice %30 {offsets = [0, 72], sizes = [9, 8], strides = [1, 1]} : vector<9x96xf32> to vector<9x8xf32>
    %42 = vector.shape_cast %41 : vector<9x8xf32> to vector<1x9x8xf32>
    %43 = vector.extract_strided_slice %30 {offsets = [0, 16], sizes = [9, 8], strides = [1, 1]} : vector<9x96xf32> to vector<9x8xf32>
    %44 = vector.shape_cast %43 : vector<9x8xf32> to vector<1x9x8xf32>
    %45 = vector.extract_strided_slice %30 {offsets = [0, 48], sizes = [9, 8], strides = [1, 1]} : vector<9x96xf32> to vector<9x8xf32>
    %46 = vector.shape_cast %45 : vector<9x8xf32> to vector<1x9x8xf32>
    %47 = vector.extract_strided_slice %30 {offsets = [0, 80], sizes = [9, 8], strides = [1, 1]} : vector<9x96xf32> to vector<9x8xf32>
    %48 = vector.shape_cast %47 : vector<9x8xf32> to vector<1x9x8xf32>
    %49 = vector.extract_strided_slice %30 {offsets = [0, 24], sizes = [9, 8], strides = [1, 1]} : vector<9x96xf32> to vector<9x8xf32>
    %50 = vector.shape_cast %49 : vector<9x8xf32> to vector<1x9x8xf32>
    %51 = vector.extract_strided_slice %30 {offsets = [0, 56], sizes = [9, 8], strides = [1, 1]} : vector<9x96xf32> to vector<9x8xf32>
    %52 = vector.shape_cast %51 : vector<9x8xf32> to vector<1x9x8xf32>
    %53 = vector.extract_strided_slice %30 {offsets = [0, 88], sizes = [9, 8], strides = [1, 1]} : vector<9x96xf32> to vector<9x8xf32>
    %54 = vector.shape_cast %53 : vector<9x8xf32> to vector<1x9x8xf32>
    %55 = tpu.concatenate %7, %13, %19, %25, %32, %38, %44, %50 in 0 : vector<1x9x8xf32>, vector<1x9x8xf32>, vector<1x9x8xf32>, vector<1x9x8xf32>, vector<1x9x8xf32>, vector<1x9x8xf32>, vector<1x9x8xf32>, vector<1x9x8xf32> -> vector<8x9x8xf32>
    %56 = tpu.concatenate %9, %15, %21, %27, %34, %40, %46, %52 in 0 : vector<1x9x8xf32>, vector<1x9x8xf32>, vector<1x9x8xf32>, vector<1x9x8xf32>, vector<1x9x8xf32>, vector<1x9x8xf32>, vector<1x9x8xf32>, vector<1x9x8xf32> -> vector<8x9x8xf32>
    %57 = tpu.concatenate %11, %17, %23, %29, %36, %42, %48, %54 in 0 : vector<1x9x8xf32>, vector<1x9x8xf32>, vector<1x9x8xf32>, vector<1x9x8xf32>, vector<1x9x8xf32>, vector<1x9x8xf32>, vector<1x9x8xf32>, vector<1x9x8xf32> -> vector<8x9x8xf32>
    "tpu.trace_start"() <{level = 10 : i32, message = "gqd,gkd->gqk"}> : () -> ()
    %cst_7 = arith.constant dense<0.000000e+00> : vector<8x9x9xf32>
    %58 = tpu.matmul %55, %56, %cst_7 {dimension_numbers = #tpu.dot_dimension_numbers<[2], [2], [1], [1], [0, 0, 0, 1, 1, 1], [0], [0]>} : vector<8x9x8xf32>, vector<8x9x8xf32>, vector<8x9x9xf32> -> vector<8x9x9xf32>
    "tpu.trace_stop"() : () -> ()
    %59 = tpu.iota {dimensions = array<i32: 0>} : vector<9x9xi32>
    %60 = tpu.iota {dimensions = array<i32: 1>} : vector<9x9xi32>
    %61 = arith.cmpi sle, %60, %59 : vector<9x9xi32>
    %cst_8 = arith.constant 0.000000e+00 : f32
    %cst_9 = arith.constant 0xFF800000 : f32
    %62 = vector.broadcast %cst_8 : f32 to vector<9x9xf32>
    %63 = vector.broadcast %cst_9 : f32 to vector<9x9xf32>
    %64 = arith.select %61, %62, %63 : vector<9x9xi1>, vector<9x9xf32>
    %65 = vector.shape_cast %64 : vector<9x9xf32> to vector<1x9x9xf32>
    %66 = vector.broadcast %65 : vector<1x9x9xf32> to vector<8x9x9xf32>
    %67 = arith.addf %58, %66 : vector<8x9x9xf32>
    %cst_10 = arith.constant dense<0xFF800000> : vector<8x9xf32>
    %68 = vector.multi_reduction <maximumf>, %67, %cst_10 [2] : vector<8x9x9xf32> to vector<8x9xf32>
    %69 = vector.shape_cast %68 : vector<8x9xf32> to vector<8x9x1xf32>
    %70 = vector.broadcast %69 : vector<8x9x1xf32> to vector<8x9x9xf32>
    %71 = arith.subf %67, %70 : vector<8x9x9xf32>
    %72 = math.exp %71 : vector<8x9x9xf32>
    %cst_11 = arith.constant dense<0.000000e+00> : vector<8x9xf32>
    %73 = vector.multi_reduction <add>, %72, %cst_11 [2] : vector<8x9x9xf32> to vector<8x9xf32>
    %74 = vector.shape_cast %73 : vector<8x9xf32> to vector<8x9x1xf32>
    %75 = tpu.reciprocal %74 : vector<8x9x1xf32> -> vector<8x9x1xf32>
    %76 = vector.broadcast %75 : vector<8x9x1xf32> to vector<8x9x9xf32>
    %77 = arith.mulf %72, %76 : vector<8x9x9xf32>
    %78 = vector.shape_cast %77 : vector<8x9x9xf32> to vector<2x4x9x9xf32>
    %c0_12 = arith.constant 0 : index
    %c0_13 = arith.constant 0 : index
    %c0_14 = arith.constant 0 : index
    %c0_15 = arith.constant 0 : index
    %79 = vector.load %arg5[%c0_12, %c0_13, %c0_14, %c0_15] : memref<2x4x9x9xf32, #tpu.memory_space<vmem>>, vector<2x4x9x9xf32>
    tpu.vector_store %arg5[%c0_12, %c0_13, %c0_14, %c0_15], %78 {strides = array<i32>} : memref<2x4x9x9xf32, #tpu.memory_space<vmem>>, vector<2x4x9x9xf32>,
    "tpu.trace_start"() <{level = 10 : i32, message = "gqk,gkd->gqd"}> : () -> ()
    %cst_16 = arith.constant dense<0.000000e+00> : vector<8x9x8xf32>
    %80 = tpu.matmul %77, %57, %cst_16 {dimension_numbers = #tpu.dot_dimension_numbers<[2], [1], [1], [2], [0, 0, 0, 1, 1, 2], [0], [0]>} : vector<8x9x9xf32>, vector<8x9x8xf32>, vector<8x9x8xf32> -> vector<8x9x8xf32>
    "tpu.trace_stop"() : () -> ()
    %81 = vector.extract_strided_slice %80 {offsets = [0, 0, 0], sizes = [1, 9, 8], strides = [1, 1, 1]} : vector<8x9x8xf32> to vector<1x9x8xf32>
    %82 = vector.shape_cast %81 : vector<1x9x8xf32> to vector<9x8xf32>
    %83 = vector.extract_strided_slice %80 {offsets = [1, 0, 0], sizes = [1, 9, 8], strides = [1, 1, 1]} : vector<8x9x8xf32> to vector<1x9x8xf32>
    %84 = vector.shape_cast %83 : vector<1x9x8xf32> to vector<9x8xf32>
    %85 = vector.extract_strided_slice %80 {offsets = [2, 0, 0], sizes = [1, 9, 8], strides = [1, 1, 1]} : vector<8x9x8xf32> to vector<1x9x8xf32>
    %86 = vector.shape_cast %85 : vector<1x9x8xf32> to vector<9x8xf32>
    %87 = vector.extract_strided_slice %80 {offsets = [3, 0, 0], sizes = [1, 9, 8], strides = [1, 1, 1]} : vector<8x9x8xf32> to vector<1x9x8xf32>
    %88 = vector.shape_cast %87 : vector<1x9x8xf32> to vector<9x8xf32>
    %89 = tpu.concatenate %82, %84, %86, %88 in 1 : vector<9x8xf32>, vector<9x8xf32>, vector<9x8xf32>, vector<9x8xf32> -> vector<9x32xf32>
    %90 = vector.extract_strided_slice %80 {offsets = [4, 0, 0], sizes = [1, 9, 8], strides = [1, 1, 1]} : vector<8x9x8xf32> to vector<1x9x8xf32>
    %91 = vector.shape_cast %90 : vector<1x9x8xf32> to vector<9x8xf32>
    %92 = vector.extract_strided_slice %80 {offsets = [5, 0, 0], sizes = [1, 9, 8], strides = [1, 1, 1]} : vector<8x9x8xf32> to vector<1x9x8xf32>
    %93 = vector.shape_cast %92 : vector<1x9x8xf32> to vector<9x8xf32>
    %94 = vector.extract_strided_slice %80 {offsets = [6, 0, 0], sizes = [1, 9, 8], strides = [1, 1, 1]} : vector<8x9x8xf32> to vector<1x9x8xf32>
    %95 = vector.shape_cast %94 : vector<1x9x8xf32> to vector<9x8xf32>
    %96 = vector.extract_strided_slice %80 {offsets = [7, 0, 0], sizes = [1, 9, 8], strides = [1, 1, 1]} : vector<8x9x8xf32> to vector<1x9x8xf32>
    %97 = vector.shape_cast %96 : vector<1x9x8xf32> to vector<9x8xf32>
    %98 = tpu.concatenate %91, %93, %95, %97 in 1 : vector<9x8xf32>, vector<9x8xf32>, vector<9x8xf32>, vector<9x8xf32> -> vector<9x32xf32>
    %99 = tpu.concatenate %89, %98 in 0 : vector<9x32xf32>, vector<9x32xf32> -> vector<18x32xf32>
    %cst_17 = arith.constant dense<0.000000e+00> : vector<18x32xf32>
    %100 = tpu.matmul %99, %1, %cst_17 {dimension_numbers = #tpu.dot_dimension_numbers<[1], [0], [0], [1], [0, 0, 1, 1], [], []>} : vector<18x32xf32>, vector<32x32xf32>, vector<18x32xf32> -> vector<18x32xf32>
    %101 = vector.broadcast %2 : vector<1x32xf32> to vector<18x32xf32>
    %102 = arith.addf %100, %101 : vector<18x32xf32>
    %c0_18 = arith.constant 0 : index
    %c0_19 = arith.constant 0 : index
    %103 = vector.load %arg4[%c0_18, %c0_19] : memref<18x32xf32, #tpu.memory_space<vmem>>, vector<18x32xf32>
    tpu.vector_store %arg4[%c0_18, %c0_19], %102 {strides = array<i32>} : memref<18x32xf32, #tpu.memory_space<vmem>>, vector<18x32xf32>,
    return
  }
}

</mosaic_0001>

<llo_original>
// kernel: tpu_custom_call.1
$region0: #{tpu_custom_call.1}
  #allocation0 [shape = 'u32[]', space=smem, size = 0x4, offset = 0x4, fixed_abs, tag = 'smem constant byte address 0x4 - core index']
  #allocation1 [shape = 'u32[144,128]{1,0:T(1,128)}', space=vmem, size = 0x12000, scoped, tag = 'internal scratch']
  %s0 = inlined_call_operand.hbm [shape: f32[18,32], index: 0, kind: input, shape index: {}]
  %s1 = inlined_call_operand.hbm [shape: f32[32,96], index: 1, kind: input, shape index: {}]
  %s2 = inlined_call_operand.hbm [shape: f32[32,32], index: 2, kind: input, shape index: {}]
  %s3 = inlined_call_operand.vmem [shape: f32[1,32], index: 3, kind: input, shape index: {}]
  %s4 = inlined_call_operand.hbm [shape: f32[18,32], index: 4, kind: output, shape index: {0}]
  %s5 = inlined_call_operand.vmem [shape: f32[2,4,9,9], index: 5, kind: output, shape index: {1}]
  %6 = xla_tuple %s4, %s5
  %s7 = sld [smem:[#allocation0]]
  $region46: #{tpu_custom_call.1} parent=0
    _
  %s9 = ssub.s32 1, %s7
  %s10 = scalar_select 0, %s9, %s7
  $region1: #{tpu_custom_call.1} parent=0
    #allocation2 [shape = 'u8[12288]{0}', space=vmem, size = 0x3000, scoped, tag = 'input window, operand 0, single buffered']
    #allocation3 [shape = 's32[1]{0}', space=sflag, size = 0x4, scoped, tag = 'scoped memory for tpu_custom_call.1']
    #allocation4 [shape = 's32[1]{0}', space=sflag, size = 0x4, scoped, tag = 'scoped memory for tpu_custom_call.1']
    #allocation5 [shape = 'u8[16384]{0}', space=vmem, size = 0x4000, scoped, tag = 'input window, operand 1, single buffered']
    #allocation6 [shape = 's32[1]{0}', space=sflag, size = 0x4, scoped, tag = 'scoped memory for tpu_custom_call.1']
    #allocation7 [shape = 'u8[16384]{0}', space=vmem, size = 0x4000, scoped, tag = 'input window, operand 2, single buffered']
    #allocation8 [shape = 'u8[12288]{0}', space=vmem, size = 0x3000, scoped, tag = 'output window, operand 0, single buffered']
    %11 = vsyncpa [#allocation3], 0
    %12 = vsyncpa [#allocation6], 0
    %13 = vsyncpa [#allocation4], 0
    // Predicated region
    $region2: #{tpu_custom_call.1} parent=1 // pred_check
      _
    $region3: #{tpu_custom_call.1} parent=1 // pred_check_branch
      %15 = sbr.rel (0) target = $region5
    $region4: #{tpu_custom_call.1} parent=1 // pred_region
      %s17 = ssub.s32 384, 384
      %18 = vsyncadd [#allocation3], %s17
      %s19 = sshll.u32 [#allocation2], 4
      %s20 = int_to_ptr.vmem [resolvable:$true] %s19
      %25 = dma.hbm_to_vmem [thread:$0]  %s0, 384, %s20, [#allocation3], 128, 128, 8
    $region5: #{tpu_custom_call.1} parent=1 // pred_fallthru
      _
    // Predicated region
    $region6: #{tpu_custom_call.1} parent=1 // pred_check
      _
    $region7: #{tpu_custom_call.1} parent=1 // pred_check_branch
      %27 = sbr.rel (0) target = $region9
    $region8: #{tpu_custom_call.1} parent=1 // pred_region
      %s29 = ssub.s32 512, 512
      %30 = vsyncadd [#allocation6], %s29
      %s31 = sshll.u32 [#allocation5], 4
      %s32 = int_to_ptr.vmem [resolvable:$true] %s31
      %37 = dma.hbm_to_vmem [thread:$0]  %s1, 512, %s32, [#allocation6], 128, 128, 8
    $region9: #{tpu_custom_call.1} parent=1 // pred_fallthru
      _
    // Predicated region
    $region10: #{tpu_custom_call.1} parent=1 // pred_check
      _
    $region11: #{tpu_custom_call.1} parent=1 // pred_check_branch
      %39 = sbr.rel (0) target = $region13
    $region12: #{tpu_custom_call.1} parent=1 // pred_region
      %s41 = ssub.s32 512, 512
      %42 = vsyncadd [#allocation6], %s41
      %s43 = sshll.u32 [#allocation7], 4
      %s44 = int_to_ptr.vmem [resolvable:$true] %s43
      %49 = dma.hbm_to_vmem [thread:$0]  %s2, 512, %s44, [#allocation6], 128, 128, 8
    $region13: #{tpu_custom_call.1} parent=1 // pred_fallthru
      _
    // Predicated region
    $region14: #{tpu_custom_call.1} parent=1 // pred_check
      _
    $region15: #{tpu_custom_call.1} parent=1 // pred_check_branch
      %51 = sbr.rel (0) target = $region17
    $region16: #{tpu_custom_call.1} parent=1 // pred_region
      _
    $region17: #{tpu_custom_call.1} parent=1 // pred_fallthru
      _
    // Predicated region
    $region18: #{tpu_custom_call.1} parent=1 // pred_check
      _
    $region19: #{tpu_custom_call.1} parent=1 // pred_check_branch
      %53 = sbr.rel (0) target = $region21
    $region20: #{tpu_custom_call.1} parent=1 // pred_region
      %54 = dma.done [#allocation3], 384
    $region21: #{tpu_custom_call.1} parent=1 // pred_fallthru
      _
    // Predicated region
    $region22: #{tpu_custom_call.1} parent=1 // pred_check
      _
    $region23: #{tpu_custom_call.1} parent=1 // pred_check_branch
      %56 = sbr.rel (0) target = $region25
    $region24: #{tpu_custom_call.1} parent=1 // pred_region
      %57 = dma.done [#allocation6], 512
    $region25: #{tpu_custom_call.1} parent=1 // pred_fallthru
      _
    // Predicated region
    $region26: #{tpu_custom_call.1} parent=1 // pred_check
      _
    $region27: #{tpu_custom_call.1} parent=1 // pred_check_branch
      %59 = sbr.rel (0) target = $region29
    $region28: #{tpu_custom_call.1} parent=1 // pred_region
      %60 = dma.done [#allocation6], 512
    $region29: #{tpu_custom_call.1} parent=1 // pred_fallthru
      _
    %v61 = vld [vmem:[#allocation5] sm:$0xff]
    %v62 = vld [vmem:[#allocation5 + $0x8] sm:$0xff]
    %v63 = vld [vmem:[#allocation5 + $0x10] sm:$0xff]
    %v64 = vld [vmem:[#allocation5 + $0x18] sm:$0xff]
    %v65 = vld [vmem:[#allocation7] sm:$0xff]
    %v66 = vld [vmem:[#allocation7 + $0x8] sm:$0xff]
    %v67 = vld [vmem:[#allocation7 + $0x10] sm:$0xff]
    %v68 = vld [vmem:[#allocation7 + $0x18] sm:$0xff]
    %v69 = vld [vmem:[%s3] sm:$0x1]
    %v70 = vld [vmem:[#allocation2] sm:$0xff]
    %v71 = vld [vmem:[#allocation2 + $0x8] sm:$0xff]
    %v72 = vld [vmem:[#allocation2 + $0x10] sm:$0x3]
    %vm73 = vcmask 261120
    %v75 = vsel %vm73, %v70, 0
    %v78 = vsel %vm73, %v71, 0
    %v81 = vsel %vm73, %v72, 0
    %83 = vmatprep.subr.mxu0 0.0
    %84 = vmatpush1.msra.mxu0 %v61
    %85 = vmatprep.subr.mxu0 0.0
    %86 = vmatpush1.msra.mxu0 %v62
    %87 = vmatprep.subr.mxu0 0.0
    %88 = vmatpush1.msra.mxu0 %v63
    %89 = vmatprep.subr.mxu0 0.0
    %90 = vmatpush1.msra.mxu0 %v64
    %91 = vmatprep.subr.mxu0 0.0
    %92 = vmatpush1.msra.mxu0 0.0
    %93 = vmatprep.subr.mxu0 0.0
    %94 = vmatpush1.msra.mxu0 0.0
    %95 = vmatprep.subr.mxu0 0.0
    %96 = vmatpush1.msra.mxu0 0.0
    %97 = vmatprep.subr.mxu0 0.0
    %98 = vmatpush1.msra.mxu0 0.0
    %99 = vmatprep.subr.mxu0 0.0
    %100 = vmatpush1.msra.mxu0 0.0
    %101 = vmatprep.subr.mxu0 0.0
    %102 = vmatpush1.msra.mxu0 0.0
    %103 = vmatprep.subr.mxu0 0.0
    %104 = vmatpush1.msra.mxu0 0.0
    %105 = vmatprep.subr.mxu0 0.0
    %106 = vmatpush1.msra.mxu0 0.0
    %107 = vmatprep.subr.mxu0 0.0
    %108 = vmatpush1.msra.mxu0 0.0
    %109 = vmatprep.subr.mxu0 0.0
    %110 = vmatpush1.msra.mxu0 0.0
    %111 = vmatprep.subr.mxu0 0.0
    %112 = vmatpush1.msra.mxu0 0.0
    %113 = vmatprep.subr.mxu0 0.0
    %114 = vmatpush1.msra.mxu0 0.0
    %115 = vmatprep.subr.mxu0 0.0
    %116 = vmatpush1.msra.mxu0 0.0
    %117 = vmatprep.subr.mxu0 0.0
    %118 = vmatpush1.msra.mxu0 0.0
    %119 = vmatprep.subr.mxu0 0.0
    %120 = vmatpush1.msra.mxu0 0.0
    %121 = vmatprep.subr.mxu0 0.0
    %122 = vmatpush1.msra.mxu0 0.0
    %123 = vmatprep.subr.mxu0 0.0
    %124 = vmatpush1.msra.mxu0 0.0
    %125 = vmatprep.subr.mxu0 0.0
    %126 = vmatpush1.msra.mxu0 0.0
    %127 = vmatprep.subr.mxu0 0.0
    %128 = vmatpush1.msra.mxu0 0.0
    %129 = vmatprep.subr.mxu0 0.0
    %130 = vmatpush1.msra.mxu0 0.0
    %131 = vmatprep.subr.mxu0 0.0
    %132 = vmatpush1.msra.mxu0 0.0
    %133 = vmatprep.subr.mxu0 0.0
    %134 = vmatpush1.msra.mxu0 0.0
    %135 = vmatprep.subr.mxu0 0.0
    %136 = vmatpush1.msra.mxu0 0.0
    %137 = vmatprep.subr.mxu0 0.0
    %138 = vmatpush1.msra.mxu0 0.0
    %139 = vmatprep.subr.mxu0 0.0
    %140 = vmatpush1.msra.mxu0 0.0
    %141 = vmatprep.subr.mxu0 0.0
    %142 = vmatpush1.msra.mxu0 0.0
    %143 = vmatprep.subr.mxu0 0.0
    %144 = vmatpush1.msra.mxu0 0.0
    %145 = vmatprep.subr.mxu0 0.0
    %146 = vmatpush1.msra.mxu0 0.0
    %147 = vmatprep.mubr.f32.mxu0 0.0
    %148 = vmatmul.mubr.f32.gmra.mrb[0].mxu0 %v75
    %v149 = vpop.f32.mrb[0].mxu0
    %v150 = vadd.f32 0.0, %v149
    %v151 = vpop.f32.mrb[0].mxu0
    %152 = vmatprep.mubr.f32.mxu0 0.0
    %153 = vmatmul.mubr.f32.gmra.mrb[0].mxu0 %v78
    %v154 = vpop.f32.mrb[0].mxu0
    %v155 = vadd.f32 0.0, %v154
    %v156 = vpop.f32.mrb[0].mxu0
    %157 = vmatprep.mubr.f32.mxu0 0.0
    %158 = vmatmul.mubr.f32.gmra.mrb[0].mxu0 %v81
    %v159 = vpop.f32.mrb[0].mxu0
    %v160 = vadd.f32 0.0, %v159
    %v161 = vpop.f32.mrb[0].mxu0
    %162 = vdwg.mxu0
    %165 = vrot.lane.b32.xlu0 %v150, 120
    %v166 = vpop.permute.xlu0 %165
    %167 = vrot.lane.b32.xlu0 %v155, 120
    %v168 = vpop.permute.xlu0 %167
    %169 = vrot.lane.b32.xlu0 %v150, 112
    %v170 = vpop.permute.xlu0 %169
    %171 = vrot.lane.b32.xlu0 %v155, 112
    %v172 = vpop.permute.xlu0 %171
    %173 = vrot.lane.b32.xlu0 %v150, 104
    %v174 = vpop.permute.xlu0 %173
    %175 = vrot.lane.b32.xlu0 %v155, 104
    %v176 = vpop.permute.xlu0 %175
    %vm178 = vcmask 1046528
    %v179 = vrot.slane %v155, 1
    %v180 = vrot.slane %v160, 1
    %v181 = vsel %vm178, %v179, %v180
    %182 = vrot.lane.b32.xlu0 %v181, 120
    %v183 = vpop.permute.xlu0 %182
    %184 = vrot.lane.b32.xlu0 %v180, 120
    %v185 = vpop.permute.xlu0 %184
    %186 = vrot.lane.b32.xlu0 %v181, 112
    %v187 = vpop.permute.xlu0 %186
    %188 = vrot.lane.b32.xlu0 %v180, 112
    %v189 = vpop.permute.xlu0 %188
    %190 = vrot.lane.b32.xlu0 %v181, 104
    %v191 = vpop.permute.xlu0 %190
    %192 = vrot.lane.b32.xlu0 %v180, 104
    %v193 = vpop.permute.xlu0 %192
    %v194 = vlaneseq
    %v195 = vshrl.u32 %v194, 7
    %v196 = vadd.s32 %v195, 8
    %v197 = vlaneseq
    %v198 = vand.u32 %v197, 127
    %vm199 = vcmp.le.s32.totalorder %v198, %v195
    %vm200 = vcmp.le.s32.totalorder %v198, %v196
    %v201 = vsel %vm199, 0.0, -inf
    %v202 = vsel %vm200, 0.0, -inf
    %203 = vrot.lane.b32.xlu0 %v150, 96
    %v204 = vpop.permute.xlu0 %203
    %205 = vrot.lane.b32.xlu0 %v155, 96
    %v206 = vpop.permute.xlu0 %205
    %vm207 = vcmask 64512
    %v208 = vsel %vm207, %v150, 0
    %v210 = vsel %vm207, %v155, 0
    %v212 = vsel %vm207, %v204, 0
    %v214 = vsel %vm207, %v206, 0
    %216 = vmatprep.subr.mxu0 0.0
    %217 = vmatpush1.xpose.msra.mxu0 %v212
    %218 = vmatprep.subr.mxu0 0.0
    %219 = vmatpush1.xpose.msra.mxu0 %v214
    %220 = vmatprep.subr.mxu0 0.0
    %221 = vmatpush1.xpose.msra.mxu0 0.0
    %222 = vmatprep.subr.mxu0 0.0
    %223 = vmatpush1.xpose.msra.mxu0 0.0
    %224 = vmatprep.subr.mxu0 0.0
    %225 = vmatpush1.xpose.msra.mxu0 0.0
    %226 = vmatprep.subr.mxu0 0.0
    %227 = vmatpush1.xpose.msra.mxu0 0.0
    %228 = vmatprep.subr.mxu0 0.0
    %229 = vmatpush1.xpose.msra.mxu0 0.0
    %230 = vmatprep.subr.mxu0 0.0
    %231 = vmatpush1.xpose.msra.mxu0 0.0
    %232 = vmatprep.subr.mxu0 0.0
    %233 = vmatpush1.xpose.msra.mxu0 0.0
    %234 = vmatprep.subr.mxu0 0.0
    %235 = vmatpush1.xpose.msra.mxu0 0.0
    %236 = vmatprep.subr.mxu0 0.0
    %237 = vmatpush1.xpose.msra.mxu0 0.0
    %238 = vmatprep.subr.mxu0 0.0
    %239 = vmatpush1.xpose.msra.mxu0 0.0
    %240 = vmatprep.subr.mxu0 0.0
    %241 = vmatpush1.xpose.msra.mxu0 0.0
    %242 = vmatprep.subr.mxu0 0.0
    %243 = vmatpush1.xpose.msra.mxu0 0.0
    %244 = vmatprep.subr.mxu0 0.0
    %245 = vmatpush1.xpose.msra.mxu0 0.0
    %246 = vmatprep.subr.mxu0 0.0
    %247 = vmatpush1.xpose.msra.mxu0 0.0
    %248 = vmatprep.subr.mxu0 0.0
    %249 = vmatpush1.xpose.msra.mxu0 0.0
    %250 = vmatprep.subr.mxu0 0.0
    %251 = vmatpush1.xpose.msra.mxu0 0.0
    %252 = vmatprep.subr.mxu0 0.0
    %253 = vmatpush1.xpose.msra.mxu0 0.0
    %254 = vmatprep.subr.mxu0 0.0
    %255 = vmatpush1.xpose.msra.mxu0 0.0
    %256 = vmatprep.subr.mxu0 0.0
    %257 = vmatpush1.xpose.msra.mxu0 0.0
    %258 = vmatprep.subr.mxu0 0.0
    %259 = vmatpush1.xpose.msra.mxu0 0.0
    %260 = vmatprep.subr.mxu0 0.0
    %261 = vmatpush1.xpose.msra.mxu0 0.0
    %262 = vmatprep.subr.mxu0 0.0
    %263 = vmatpush1.xpose.msra.mxu0 0.0
    %264 = vmatprep.subr.mxu0 0.0
    %265 = vmatpush1.xpose.msra.mxu0 0.0
    %266 = vmatprep.subr.mxu0 0.0
    %267 = vmatpush1.xpose.msra.mxu0 0.0
    %268 = vmatprep.subr.mxu0 0.0
    %269 = vmatpush1.xpose.msra.mxu0 0.0
    %270 = vmatprep.subr.mxu0 0.0
    %271 = vmatpush1.xpose.msra.mxu0 0.0
    %272 = vmatprep.subr.mxu0 0.0
    %273 = vmatpush1.xpose.msra.mxu0 0.0
    %274 = vmatprep.subr.mxu0 0.0
    %275 = vmatpush1.xpose.msra.mxu0 0.0
    %276 = vmatprep.subr.mxu0 0.0
    %277 = vmatpush1.xpose.msra.mxu0 0.0
    %278 = vmatprep.subr.mxu0 0.0
    %279 = vmatpush1.xpose.msra.mxu0 0.0
    %280 = vmatprep.mubr.f32.mxu0 0.0
    %281 = vmatmul.mubr.f32.gmra.mrb[0].mxu0 %v208
    %v282 = vpop.f32.mrb[0].mxu0
    %v283 = vadd.f32 %v201, %v282
    %v284 = vpop.f32.mrb[0].mxu0
    %285 = vmatprep.mubr.f32.mxu0 0.0
    %286 = vmatmul.mubr.f32.gmra.mrb[0].mxu0 %v210
    %v287 = vpop.f32.mrb[0].mxu0
    %v288 = vadd.f32 %v202, %v287
    %v289 = vpop.f32.mrb[0].mxu0
    %290 = vdwg.mxu0
    %291 = vrot.lane.b32.xlu0 %v166, 96
    %v292 = vpop.permute.xlu0 %291
    %293 = vrot.lane.b32.xlu0 %v168, 96
    %v294 = vpop.permute.xlu0 %293
    %v295 = vsel %vm207, %v166, 0
    %v297 = vsel %vm207, %v168, 0
    %v299 = vsel %vm207, %v292, 0
    %v301 = vsel %vm207, %v294, 0
    %303 = vmatprep.subr.mxu0 0.0
    %304 = vmatpush1.xpose.msra.mxu0 %v299
    %305 = vmatprep.subr.mxu0 0.0
    %306 = vmatpush1.xpose.msra.mxu0 %v301
    %307 = vmatprep.subr.mxu0 0.0
    %308 = vmatpush1.xpose.msra.mxu0 0.0
    %309 = vmatprep.subr.mxu0 0.0
    %310 = vmatpush1.xpose.msra.mxu0 0.0
    %311 = vmatprep.subr.mxu0 0.0
    %312 = vmatpush1.xpose.msra.mxu0 0.0
    %313 = vmatprep.subr.mxu0 0.0
    %314 = vmatpush1.xpose.msra.mxu0 0.0
    %315 = vmatprep.subr.mxu0 0.0
    %316 = vmatpush1.xpose.msra.mxu0 0.0
    %317 = vmatprep.subr.mxu0 0.0
    %318 = vmatpush1.xpose.msra.mxu0 0.0
    %319 = vmatprep.subr.mxu0 0.0
    %320 = vmatpush1.xpose.msra.mxu0 0.0
    %321 = vmatprep.subr.mxu0 0.0
    %322 = vmatpush1.xpose.msra.mxu0 0.0
    %323 = vmatprep.subr.mxu0 0.0
    %324 = vmatpush1.xpose.msra.mxu0 0.0
    %325 = vmatprep.subr.mxu0 0.0
    %326 = vmatpush1.xpose.msra.mxu0 0.0
    %327 = vmatprep.subr.mxu0 0.0
    %328 = vmatpush1.xpose.msra.mxu0 0.0
    %329 = vmatprep.subr.mxu0 0.0
    %330 = vmatpush1.xpose.msra.mxu0 0.0
    %331 = vmatprep.subr.mxu0 0.0
    %332 = vmatpush1.xpose.msra.mxu0 0.0
    %333 = vmatprep.subr.mxu0 0.0
    %334 = vmatpush1.xpose.msra.mxu0 0.0
    %335 = vmatprep.subr.mxu0 0.0
    %336 = vmatpush1.xpose.msra.mxu0 0.0
    %337 = vmatprep.subr.mxu0 0.0
    %338 = vmatpush1.xpose.msra.mxu0 0.0
    %339 = vmatprep.subr.mxu0 0.0
    %340 = vmatpush1.xpose.msra.mxu0 0.0
    %341 = vmatprep.subr.mxu0 0.0
    %342 = vmatpush1.xpose.msra.mxu0 0.0
    %343 = vmatprep.subr.mxu0 0.0
    %344 = vmatpush1.xpose.msra.mxu0 0.0
    %345 = vmatprep.subr.mxu0 0.0
    %346 = vmatpush1.xpose.msra.mxu0 0.0
    %347 = vmatprep.subr.mxu0 0.0
    %348 = vmatpush1.xpose.msra.mxu0 0.0
    %349 = vmatprep.subr.mxu0 0.0
    %350 = vmatpush1.xpose.msra.mxu0 0.0
    %351 = vmatprep.subr.mxu0 0.0
    %352 = vmatpush1.xpose.msra.mxu0 0.0
    %353 = vmatprep.subr.mxu0 0.0
    %354 = vmatpush1.xpose.msra.mxu0 0.0
    %355 = vmatprep.subr.mxu0 0.0
    %356 = vmatpush1.xpose.msra.mxu0 0.0
    %357 = vmatprep.subr.mxu0 0.0
    %358 = vmatpush1.xpose.msra.mxu0 0.0
    %359 = vmatprep.subr.mxu0 0.0
    %360 = vmatpush1.xpose.msra.mxu0 0.0
    %361 = vmatprep.subr.mxu0 0.0
    %362 = vmatpush1.xpose.msra.mxu0 0.0
    %363 = vmatprep.subr.mxu0 0.0
    %364 = vmatpush1.xpose.msra.mxu0 0.0
    %365 = vmatprep.subr.mxu0 0.0
    %366 = vmatpush1.xpose.msra.mxu0 0.0
    %367 = vmatprep.mubr.f32.mxu0 0.0
    %368 = vmatmul.mubr.f32.gmra.mrb[0].mxu0 %v295
    %v369 = vpop.f32.mrb[0].mxu0
    %v370 = vadd.f32 %v201, %v369
    %v371 = vpop.f32.mrb[0].mxu0
    %372 = vmatprep.mubr.f32.mxu0 0.0
    %373 = vmatmul.mubr.f32.gmra.mrb[0].mxu0 %v297
    %v374 = vpop.f32.mrb[0].mxu0
    %v375 = vadd.f32 %v202, %v374
    %v376 = vpop.f32.mrb[0].mxu0
    %377 = vdwg.mxu0
    %378 = vrot.lane.b32.xlu0 %v170, 96
    %v379 = vpop.permute.xlu0 %378
    %380 = vrot.lane.b32.xlu0 %v172, 96
    %v381 = vpop.permute.xlu0 %380
    %v382 = vsel %vm207, %v170, 0
    %v384 = vsel %vm207, %v172, 0
    %v386 = vsel %vm207, %v379, 0
    %v388 = vsel %vm207, %v381, 0
    %390 = vmatprep.subr.mxu0 0.0
    %391 = vmatpush1.xpose.msra.mxu0 %v386
    %392 = vmatprep.subr.mxu0 0.0
    %393 = vmatpush1.xpose.msra.mxu0 %v388
    %394 = vmatprep.subr.mxu0 0.0
    %395 = vmatpush1.xpose.msra.mxu0 0.0
    %396 = vmatprep.subr.mxu0 0.0
    %397 = vmatpush1.xpose.msra.mxu0 0.0
    %398 = vmatprep.subr.mxu0 0.0
    %399 = vmatpush1.xpose.msra.mxu0 0.0
    %400 = vmatprep.subr.mxu0 0.0
    %401 = vmatpush1.xpose.msra.mxu0 0.0
    %402 = vmatprep.subr.mxu0 0.0
    %403 = vmatpush1.xpose.msra.mxu0 0.0
    %404 = vmatprep.subr.mxu0 0.0
    %405 = vmatpush1.xpose.msra.mxu0 0.0
    %406 = vmatprep.subr.mxu0 0.0
    %407 = vmatpush1.xpose.msra.mxu0 0.0
    %408 = vmatprep.subr.mxu0 0.0
    %409 = vmatpush1.xpose.msra.mxu0 0.0
    %410 = vmatprep.subr.mxu0 0.0
    %411 = vmatpush1.xpose.msra.mxu0 0.0
    %412 = vmatprep.subr.mxu0 0.0
    %413 = vmatpush1.xpose.msra.mxu0 0.0
    %414 = vmatprep.subr.mxu0 0.0
    %415 = vmatpush1.xpose.msra.mxu0 0.0
    %416 = vmatprep.subr.mxu0 0.0
    %417 = vmatpush1.xpose.msra.mxu0 0.0
    %418 = vmatprep.subr.mxu0 0.0
    %419 = vmatpush1.xpose.msra.mxu0 0.0
    %420 = vmatprep.subr.mxu0 0.0
    %421 = vmatpush1.xpose.msra.mxu0 0.0
    %422 = vmatprep.subr.mxu0 0.0
    %423 = vmatpush1.xpose.msra.mxu0 0.0
    %424 = vmatprep.subr.mxu0 0.0
    %425 = vmatpush1.xpose.msra.mxu0 0.0
    %426 = vmatprep.subr.mxu0 0.0
    %427 = vmatpush1.xpose.msra.mxu0 0.0
    %428 = vmatprep.subr.mxu0 0.0
    %429 = vmatpush1.xpose.msra.mxu0 0.0
    %430 = vmatprep.subr.mxu0 0.0
    %431 = vmatpush1.xpose.msra.mxu0 0.0
    %432 = vmatprep.subr.mxu0 0.0
    %433 = vmatpush1.xpose.msra.mxu0 0.0
    %434 = vmatprep.subr.mxu0 0.0
    %435 = vmatpush1.xpose.msra.mxu0 0.0
    %436 = vmatprep.subr.mxu0 0.0
    %437 = vmatpush1.xpose.msra.mxu0 0.0
    %438 = vmatprep.subr.mxu0 0.0
    %439 = vmatpush1.xpose.msra.mxu0 0.0
    %440 = vmatprep.subr.mxu0 0.0
    %441 = vmatpush1.xpose.msra.mxu0 0.0
    %442 = vmatprep.subr.mxu0 0.0
    %443 = vmatpush1.xpose.msra.mxu0 0.0
    %444 = vmatprep.subr.mxu0 0.0
    %445 = vmatpush1.xpose.msra.mxu0 0.0
    %446 = vmatprep.subr.mxu0 0.0
    %447 = vmatpush1.xpose.msra.mxu0 0.0
    %448 = vmatprep.subr.mxu0 0.0
    %449 = vmatpush1.xpose.msra.mxu0 0.0
    %450 = vmatprep.subr.mxu0 0.0
    %451 = vmatpush1.xpose.msra.mxu0 0.0
    %452 = vmatprep.subr.mxu0 0.0
    %453 = vmatpush1.xpose.msra.mxu0 0.0
    %454 = vmatprep.mubr.f32.mxu0 0.0
    %455 = vmatmul.mubr.f32.gmra.mrb[0].mxu0 %v382
    %v456 = vpop.f32.mrb[0].mxu0
    %v457 = vadd.f32 %v201, %v456
    %v458 = vpop.f32.mrb[0].mxu0
    %459 = vmatprep.mubr.f32.mxu0 0.0
    %460 = vmatmul.mubr.f32.gmra.mrb[0].mxu0 %v384
    %v461 = vpop.f32.mrb[0].mxu0
    %v462 = vadd.f32 %v202, %v461
    %v463 = vpop.f32.mrb[0].mxu0
    %464 = vdwg.mxu0
    %465 = vrot.lane.b32.xlu0 %v174, 96
    %v466 = vpop.permute.xlu0 %465
    %467 = vrot.lane.b32.xlu0 %v176, 96
    %v468 = vpop.permute.xlu0 %467
    %v469 = vsel %vm207, %v174, 0
    %v471 = vsel %vm207, %v176, 0
    %v473 = vsel %vm207, %v466, 0
    %v475 = vsel %vm207, %v468, 0
    %477 = vmatprep.subr.mxu0 0.0
    %478 = vmatpush1.xpose.msra.mxu0 %v473
    %479 = vmatprep.subr.mxu0 0.0
    %480 = vmatpush1.xpose.msra.mxu0 %v475
    %481 = vmatprep.subr.mxu0 0.0
    %482 = vmatpush1.xpose.msra.mxu0 0.0
    %483 = vmatprep.subr.mxu0 0.0
    %484 = vmatpush1.xpose.msra.mxu0 0.0
    %485 = vmatprep.subr.mxu0 0.0
    %486 = vmatpush1.xpose.msra.mxu0 0.0
    %487 = vmatprep.subr.mxu0 0.0
    %488 = vmatpush1.xpose.msra.mxu0 0.0
    %489 = vmatprep.subr.mxu0 0.0
    %490 = vmatpush1.xpose.msra.mxu0 0.0
    %491 = vmatprep.subr.mxu0 0.0
    %492 = vmatpush1.xpose.msra.mxu0 0.0
    %493 = vmatprep.subr.mxu0 0.0
    %494 = vmatpush1.xpose.msra.mxu0 0.0
    %495 = vmatprep.subr.mxu0 0.0
    %496 = vmatpush1.xpose.msra.mxu0 0.0
    %497 = vmatprep.subr.mxu0 0.0
    %498 = vmatpush1.xpose.msra.mxu0 0.0
    %499 = vmatprep.subr.mxu0 0.0
    %500 = vmatpush1.xpose.msra.mxu0 0.0
    %501 = vmatprep.subr.mxu0 0.0
    %502 = vmatpush1.xpose.msra.mxu0 0.0
    %503 = vmatprep.subr.mxu0 0.0
    %504 = vmatpush1.xpose.msra.mxu0 0.0
    %505 = vmatprep.subr.mxu0 0.0
    %506 = vmatpush1.xpose.msra.mxu0 0.0
    %507 = vmatprep.subr.mxu0 0.0
    %508 = vmatpush1.xpose.msra.mxu0 0.0
    %509 = vmatprep.subr.mxu0 0.0
    %510 = vmatpush1.xpose.msra.mxu0 0.0
    %511 = vmatprep.subr.mxu0 0.0
    %512 = vmatpush1.xpose.msra.mxu0 0.0
    %513 = vmatprep.subr.mxu0 0.0
    %514 = vmatpush1.xpose.msra.mxu0 0.0
    %515 = vmatprep.subr.mxu0 0.0
    %516 = vmatpush1.xpose.msra.mxu0 0.0
    %517 = vmatprep.subr.mxu0 0.0
    %518 = vmatpush1.xpose.msra.mxu0 0.0
    %519 = vmatprep.subr.mxu0 0.0
    %520 = vmatpush1.xpose.msra.mxu0 0.0
    %521 = vmatprep.subr.mxu0 0.0
    %522 = vmatpush1.xpose.msra.mxu0 0.0
    %523 = vmatprep.subr.mxu0 0.0
    %524 = vmatpush1.xpose.msra.mxu0 0.0
    %525 = vmatprep.subr.mxu0 0.0
    %526 = vmatpush1.xpose.msra.mxu0 0.0
    %527 = vmatprep.subr.mxu0 0.0
    %528 = vmatpush1.xpose.msra.mxu0 0.0
    %529 = vmatprep.subr.mxu0 0.0
    %530 = vmatpush1.xpose.msra.mxu0 0.0
    %531 = vmatprep.subr.mxu0 0.0
    %532 = vmatpush1.xpose.msra.mxu0 0.0
    %533 = vmatprep.subr.mxu0 0.0
    %534 = vmatpush1.xpose.msra.mxu0 0.0
    %535 = vmatprep.subr.mxu0 0.0
    %536 = vmatpush1.xpose.msra.mxu0 0.0
    %537 = vmatprep.subr.mxu0 0.0
    %538 = vmatpush1.xpose.msra.mxu0 0.0
    %539 = vmatprep.subr.mxu0 0.0
    %540 = vmatpush1.xpose.msra.mxu0 0.0
    %541 = vmatprep.mubr.f32.mxu0 0.0
    %542 = vmatmul.mubr.f32.gmra.mrb[0].mxu0 %v469
    %v543 = vpop.f32.mrb[0].mxu0
    %v544 = vadd.f32 %v201, %v543
    %v545 = vpop.f32.mrb[0].mxu0
    %546 = vmatprep.mubr.f32.mxu0 0.0
    %547 = vmatmul.mubr.f32.gmra.mrb[0].mxu0 %v471
    %v548 = vpop.f32.mrb[0].mxu0
    %v549 = vadd.f32 %v202, %v548
    %v550 = vpop.f32.mrb[0].mxu0
    %551 = vdwg.mxu0
    %552 = vrot.lane.b32.xlu0 %v181, 96
    %v553 = vpop.permute.xlu0 %552
    %554 = vrot.lane.b32.xlu0 %v180, 96
    %v555 = vpop.permute.xlu0 %554
    %v556 = vsel %vm207, %v181, 0
    %v558 = vsel %vm207, %v180, 0
    %v560 = vsel %vm207, %v553, 0
    %v562 = vsel %vm207, %v555, 0
    %564 = vmatprep.subr.mxu0 0.0
    %565 = vmatpush1.xpose.msra.mxu0 %v560
    %566 = vmatprep.subr.mxu0 0.0
    %567 = vmatpush1.xpose.msra.mxu0 %v562
    %568 = vmatprep.subr.mxu0 0.0
    %569 = vmatpush1.xpose.msra.mxu0 0.0
    %570 = vmatprep.subr.mxu0 0.0
    %571 = vmatpush1.xpose.msra.mxu0 0.0
    %572 = vmatprep.subr.mxu0 0.0
    %573 = vmatpush1.xpose.msra.mxu0 0.0
    %574 = vmatprep.subr.mxu0 0.0
    %575 = vmatpush1.xpose.msra.mxu0 0.0
    %576 = vmatprep.subr.mxu0 0.0
    %577 = vmatpush1.xpose.msra.mxu0 0.0
    %578 = vmatprep.subr.mxu0 0.0
    %579 = vmatpush1.xpose.msra.mxu0 0.0
    %580 = vmatprep.subr.mxu0 0.0
    %581 = vmatpush1.xpose.msra.mxu0 0.0
    %582 = vmatprep.subr.mxu0 0.0
    %583 = vmatpush1.xpose.msra.mxu0 0.0
    %584 = vmatprep.subr.mxu0 0.0
    %585 = vmatpush1.xpose.msra.mxu0 0.0
    %586 = vmatprep.subr.mxu0 0.0
    %587 = vmatpush1.xpose.msra.mxu0 0.0
    %588 = vmatprep.subr.mxu0 0.0
    %589 = vmatpush1.xpose.msra.mxu0 0.0
    %590 = vmatprep.subr.mxu0 0.0
    %591 = vmatpush1.xpose.msra.mxu0 0.0
    %592 = vmatprep.subr.mxu0 0.0
    %593 = vmatpush1.xpose.msra.mxu0 0.0
    %594 = vmatprep.subr.mxu0 0.0
    %595 = vmatpush1.xpose.msra.mxu0 0.0
    %596 = vmatprep.subr.mxu0 0.0
    %597 = vmatpush1.xpose.msra.mxu0 0.0
    %598 = vmatprep.subr.mxu0 0.0
    %599 = vmatpush1.xpose.msra.mxu0 0.0
    %600 = vmatprep.subr.mxu0 0.0
    %601 = vmatpush1.xpose.msra.mxu0 0.0
    %602 = vmatprep.subr.mxu0 0.0
    %603 = vmatpush1.xpose.msra.mxu0 0.0
    %604 = vmatprep.subr.mxu0 0.0
    %605 = vmatpush1.xpose.msra.mxu0 0.0
    %606 = vmatprep.subr.mxu0 0.0
    %607 = vmatpush1.xpose.msra.mxu0 0.0
    %608 = vmatprep.subr.mxu0 0.0
    %609 = vmatpush1.xpose.msra.mxu0 0.0
    %610 = vmatprep.subr.mxu0 0.0
    %611 = vmatpush1.xpose.msra.mxu0 0.0
    %612 = vmatprep.subr.mxu0 0.0
    %613 = vmatpush1.xpose.msra.mxu0 0.0
    %614 = vmatprep.subr.mxu0 0.0
    %615 = vmatpush1.xpose.msra.mxu0 0.0
    %616 = vmatprep.subr.mxu0 0.0
    %617 = vmatpush1.xpose.msra.mxu0 0.0
    %618 = vmatprep.subr.mxu0 0.0
    %619 = vmatpush1.xpose.msra.mxu0 0.0
    %620 = vmatprep.subr.mxu0 0.0
    %621 = vmatpush1.xpose.msra.mxu0 0.0
    %622 = vmatprep.subr.mxu0 0.0
    %623 = vmatpush1.xpose.msra.mxu0 0.0
    %624 = vmatprep.subr.mxu0 0.0
    %625 = vmatpush1.xpose.msra.mxu0 0.0
    %626 = vmatprep.subr.mxu0 0.0
    %627 = vmatpush1.xpose.msra.mxu0 0.0
    %628 = vmatprep.mubr.f32.mxu0 0.0
    %629 = vmatmul.mubr.f32.gmra.mrb[0].mxu0 %v556
    %v630 = vpop.f32.mrb[0].mxu0
    %v631 = vadd.f32 %v201, %v630
    %v632 = vpop.f32.mrb[0].mxu0
    %633 = vmatprep.mubr.f32.mxu0 0.0
    %634 = vmatmul.mubr.f32.gmra.mrb[0].mxu0 %v558
    %v635 = vpop.f32.mrb[0].mxu0
    %v636 = vadd.f32 %v202, %v635
    %v637 = vpop.f32.mrb[0].mxu0
    %638 = vdwg.mxu0
    %639 = vrot.lane.b32.xlu0 %v183, 96
    %v640 = vpop.permute.xlu0 %639
    %641 = vrot.lane.b32.xlu0 %v185, 96
    %v642 = vpop.permute.xlu0 %641
    %v643 = vsel %vm207, %v183, 0
    %v645 = vsel %vm207, %v185, 0
    %v647 = vsel %vm207, %v640, 0
    %v649 = vsel %vm207, %v642, 0
    %651 = vmatprep.subr.mxu0 0.0
    %652 = vmatpush1.xpose.msra.mxu0 %v647
    %653 = vmatprep.subr.mxu0 0.0
    %654 = vmatpush1.xpose.msra.mxu0 %v649
    %655 = vmatprep.subr.mxu0 0.0
    %656 = vmatpush1.xpose.msra.mxu0 0.0
    %657 = vmatprep.subr.mxu0 0.0
    %658 = vmatpush1.xpose.msra.mxu0 0.0
    %659 = vmatprep.subr.mxu0 0.0
    %660 = vmatpush1.xpose.msra.mxu0 0.0
    %661 = vmatprep.subr.mxu0 0.0
    %662 = vmatpush1.xpose.msra.mxu0 0.0
    %663 = vmatprep.subr.mxu0 0.0
    %664 = vmatpush1.xpose.msra.mxu0 0.0
    %665 = vmatprep.subr.mxu0 0.0
    %666 = vmatpush1.xpose.msra.mxu0 0.0
    %667 = vmatprep.subr.mxu0 0.0
    %668 = vmatpush1.xpose.msra.mxu0 0.0
    %669 = vmatprep.subr.mxu0 0.0
    %670 = vmatpush1.xpose.msra.mxu0 0.0
    %671 = vmatprep.subr.mxu0 0.0
    %672 = vmatpush1.xpose.msra.mxu0 0.0
    %673 = vmatprep.subr.mxu0 0.0
    %674 = vmatpush1.xpose.msra.mxu0 0.0
    %675 = vmatprep.subr.mxu0 0.0
    %676 = vmatpush1.xpose.msra.mxu0 0.0
    %677 = vmatprep.subr.mxu0 0.0
    %678 = vmatpush1.xpose.msra.mxu0 0.0
    %679 = vmatprep.subr.mxu0 0.0
    %680 = vmatpush1.xpose.msra.mxu0 0.0
    %681 = vmatprep.subr.mxu0 0.0
    %682 = vmatpush1.xpose.msra.mxu0 0.0
    %683 = vmatprep.subr.mxu0 0.0
    %684 = vmatpush1.xpose.msra.mxu0 0.0
    %685 = vmatprep.subr.mxu0 0.0
    %686 = vmatpush1.xpose.msra.mxu0 0.0
    %687 = vmatprep.subr.mxu0 0.0
    %688 = vmatpush1.xpose.msra.mxu0 0.0
    %689 = vmatprep.subr.mxu0 0.0
    %690 = vmatpush1.xpose.msra.mxu0 0.0
    %691 = vmatprep.subr.mxu0 0.0
    %692 = vmatpush1.xpose.msra.mxu0 0.0
    %693 = vmatprep.subr.mxu0 0.0
    %694 = vmatpush1.xpose.msra.mxu0 0.0
    %695 = vmatprep.subr.mxu0 0.0
    %696 = vmatpush1.xpose.msra.mxu0 0.0
    %697 = vmatprep.subr.mxu0 0.0
    %698 = vmatpush1.xpose.msra.mxu0 0.0
    %699 = vmatprep.subr.mxu0 0.0
    %700 = vmatpush1.xpose.msra.mxu0 0.0
    %701 = vmatprep.subr.mxu0 0.0
    %702 = vmatpush1.xpose.msra.mxu0 0.0
    %703 = vmatprep.subr.mxu0 0.0
    %704 = vmatpush1.xpose.msra.mxu0 0.0
    %705 = vmatprep.subr.mxu0 0.0
    %706 = vmatpush1.xpose.msra.mxu0 0.0
    %707 = vmatprep.subr.mxu0 0.0
    %708 = vmatpush1.xpose.msra.mxu0 0.0
    %709 = vmatprep.subr.mxu0 0.0
    %710 = vmatpush1.xpose.msra.mxu0 0.0
    %711 = vmatprep.subr.mxu0 0.0
    %712 = vmatpush1.xpose.msra.mxu0 0.0
    %713 = vmatprep.subr.mxu0 0.0
    %714 = vmatpush1.xpose.msra.mxu0 0.0
    %715 = vmatprep.mubr.f32.mxu0 0.0
    %716 = vmatmul.mubr.f32.gmra.mrb[0].mxu0 %v643
    %v717 = vpop.f32.mrb[0].mxu0
    %v718 = vadd.f32 %v201, %v717
    %v719 = vpop.f32.mrb[0].mxu0
    %720 = vmatprep.mubr.f32.mxu0 0.0
    %721 = vmatmul.mubr.f32.gmra.mrb[0].mxu0 %v645
    %v722 = vpop.f32.mrb[0].mxu0
    %v723 = vadd.f32 %v202, %v722
    %v724 = vpop.f32.mrb[0].mxu0
    %725 = vdwg.mxu0
    %726 = vrot.lane.b32.xlu0 %v187, 96
    %v727 = vpop.permute.xlu0 %726
    %728 = vrot.lane.b32.xlu0 %v189, 96
    %v729 = vpop.permute.xlu0 %728
    %v730 = vsel %vm207, %v187, 0
    %v732 = vsel %vm207, %v189, 0
    %v734 = vsel %vm207, %v727, 0
    %v736 = vsel %vm207, %v729, 0
    %738 = vmatprep.subr.mxu0 0.0
    %739 = vmatpush1.xpose.msra.mxu0 %v734
    %740 = vmatprep.subr.mxu0 0.0
    %741 = vmatpush1.xpose.msra.mxu0 %v736
    %742 = vmatprep.subr.mxu0 0.0
    %743 = vmatpush1.xpose.msra.mxu0 0.0
    %744 = vmatprep.subr.mxu0 0.0
    %745 = vmatpush1.xpose.msra.mxu0 0.0
    %746 = vmatprep.subr.mxu0 0.0
    %747 = vmatpush1.xpose.msra.mxu0 0.0
    %748 = vmatprep.subr.mxu0 0.0
    %749 = vmatpush1.xpose.msra.mxu0 0.0
    %750 = vmatprep.subr.mxu0 0.0
    %751 = vmatpush1.xpose.msra.mxu0 0.0
    %752 = vmatprep.subr.mxu0 0.0
    %753 = vmatpush1.xpose.msra.mxu0 0.0
    %754 = vmatprep.subr.mxu0 0.0
    %755 = vmatpush1.xpose.msra.mxu0 0.0
    %756 = vmatprep.subr.mxu0 0.0
    %757 = vmatpush1.xpose.msra.mxu0 0.0
    %758 = vmatprep.subr.mxu0 0.0
    %759 = vmatpush1.xpose.msra.mxu0 0.0
    %760 = vmatprep.subr.mxu0 0.0
    %761 = vmatpush1.xpose.msra.mxu0 0.0
    %762 = vmatprep.subr.mxu0 0.0
    %763 = vmatpush1.xpose.msra.mxu0 0.0
    %764 = vmatprep.subr.mxu0 0.0
    %765 = vmatpush1.xpose.msra.mxu0 0.0
    %766 = vmatprep.subr.mxu0 0.0
    %767 = vmatpush1.xpose.msra.mxu0 0.0
    %768 = vmatprep.subr.mxu0 0.0
    %769 = vmatpush1.xpose.msra.mxu0 0.0
    %770 = vmatprep.subr.mxu0 0.0
    %771 = vmatpush1.xpose.msra.mxu0 0.0
    %772 = vmatprep.subr.mxu0 0.0
    %773 = vmatpush1.xpose.msra.mxu0 0.0
    %774 = vmatprep.subr.mxu0 0.0
    %775 = vmatpush1.xpose.msra.mxu0 0.0
    %776 = vmatprep.subr.mxu0 0.0
    %777 = vmatpush1.xpose.msra.mxu0 0.0
    %778 = vmatprep.subr.mxu0 0.0
    %779 = vmatpush1.xpose.msra.mxu0 0.0
    %780 = vmatprep.subr.mxu0 0.0
    %781 = vmatpush1.xpose.msra.mxu0 0.0
    %782 = vmatprep.subr.mxu0 0.0
    %783 = vmatpush1.xpose.msra.mxu0 0.0
    %784 = vmatprep.subr.mxu0 0.0
    %785 = vmatpush1.xpose.msra.mxu0 0.0
    %786 = vmatprep.subr.mxu0 0.0
    %787 = vmatpush1.xpose.msra.mxu0 0.0
    %788 = vmatprep.subr.mxu0 0.0
    %789 = vmatpush1.xpose.msra.mxu0 0.0
    %790 = vmatprep.subr.mxu0 0.0
    %791 = vmatpush1.xpose.msra.mxu0 0.0
    %792 = vmatprep.subr.mxu0 0.0
    %793 = vmatpush1.xpose.msra.mxu0 0.0
    %794 = vmatprep.subr.mxu0 0.0
    %795 = vmatpush1.xpose.msra.mxu0 0.0
    %796 = vmatprep.subr.mxu0 0.0
    %797 = vmatpush1.xpose.msra.mxu0 0.0
    %798 = vmatprep.subr.mxu0 0.0
    %799 = vmatpush1.xpose.msra.mxu0 0.0
    %800 = vmatprep.subr.mxu0 0.0
    %801 = vmatpush1.xpose.msra.mxu0 0.0
    %802 = vmatprep.mubr.f32.mxu0 0.0
    %803 = vmatmul.mubr.f32.gmra.mrb[0].mxu0 %v730
    %v804 = vpop.f32.mrb[0].mxu0
    %v805 = vadd.f32 %v201, %v804
    %v806 = vpop.f32.mrb[0].mxu0
    %807 = vmatprep.mubr.f32.mxu0 0.0
    %808 = vmatmul.mubr.f32.gmra.mrb[0].mxu0 %v732
    %v809 = vpop.f32.mrb[0].mxu0
    %v810 = vadd.f32 %v202, %v809
    %v811 = vpop.f32.mrb[0].mxu0
    %812 = vdwg.mxu0
    %813 = vrot.lane.b32.xlu0 %v191, 96
    %v814 = vpop.permute.xlu0 %813
    %815 = vrot.lane.b32.xlu0 %v193, 96
    %v816 = vpop.permute.xlu0 %815
    %v817 = vsel %vm207, %v191, 0
    %v819 = vsel %vm207, %v193, 0
    %v821 = vsel %vm207, %v814, 0
    %v823 = vsel %vm207, %v816, 0
    %825 = vmatprep.subr.mxu0 0.0
    %826 = vmatpush1.xpose.msra.mxu0 %v821
    %827 = vmatprep.subr.mxu0 0.0
    %828 = vmatpush1.xpose.msra.mxu0 %v823
    %829 = vmatprep.subr.mxu0 0.0
    %830 = vmatpush1.xpose.msra.mxu0 0.0
    %831 = vmatprep.subr.mxu0 0.0
    %832 = vmatpush1.xpose.msra.mxu0 0.0
    %833 = vmatprep.subr.mxu0 0.0
    %834 = vmatpush1.xpose.msra.mxu0 0.0
    %835 = vmatprep.subr.mxu0 0.0
    %836 = vmatpush1.xpose.msra.mxu0 0.0
    %837 = vmatprep.subr.mxu0 0.0
    %838 = vmatpush1.xpose.msra.mxu0 0.0
    %839 = vmatprep.subr.mxu0 0.0
    %840 = vmatpush1.xpose.msra.mxu0 0.0
    %841 = vmatprep.subr.mxu0 0.0
    %842 = vmatpush1.xpose.msra.mxu0 0.0
    %843 = vmatprep.subr.mxu0 0.0
    %844 = vmatpush1.xpose.msra.mxu0 0.0
    %845 = vmatprep.subr.mxu0 0.0
    %846 = vmatpush1.xpose.msra.mxu0 0.0
    %847 = vmatprep.subr.mxu0 0.0
    %848 = vmatpush1.xpose.msra.mxu0 0.0
    %849 = vmatprep.subr.mxu0 0.0
    %850 = vmatpush1.xpose.msra.mxu0 0.0
    %851 = vmatprep.subr.mxu0 0.0
    %852 = vmatpush1.xpose.msra.mxu0 0.0
    %853 = vmatprep.subr.mxu0 0.0
    %854 = vmatpush1.xpose.msra.mxu0 0.0
    %855 = vmatprep.subr.mxu0 0.0
    %856 = vmatpush1.xpose.msra.mxu0 0.0
    %857 = vmatprep.subr.mxu0 0.0
    %858 = vmatpush1.xpose.msra.mxu0 0.0
    %859 = vmatprep.subr.mxu0 0.0
    %860 = vmatpush1.xpose.msra.mxu0 0.0
    %861 = vmatprep.subr.mxu0 0.0
    %862 = vmatpush1.xpose.msra.mxu0 0.0
    %863 = vmatprep.subr.mxu0 0.0
    %864 = vmatpush1.xpose.msra.mxu0 0.0
    %865 = vmatprep.subr.mxu0 0.0
    %866 = vmatpush1.xpose.msra.mxu0 0.0
    %867 = vmatprep.subr.mxu0 0.0
    %868 = vmatpush1.xpose.msra.mxu0 0.0
    %869 = vmatprep.subr.mxu0 0.0
    %870 = vmatpush1.xpose.msra.mxu0 0.0
    %871 = vmatprep.subr.mxu0 0.0
    %872 = vmatpush1.xpose.msra.mxu0 0.0
    %873 = vmatprep.subr.mxu0 0.0
    %874 = vmatpush1.xpose.msra.mxu0 0.0
    %875 = vmatprep.subr.mxu0 0.0
    %876 = vmatpush1.xpose.msra.mxu0 0.0
    %877 = vmatprep.subr.mxu0 0.0
    %878 = vmatpush1.xpose.msra.mxu0 0.0
    %879 = vmatprep.subr.mxu0 0.0
    %880 = vmatpush1.xpose.msra.mxu0 0.0
    %881 = vmatprep.subr.mxu0 0.0
    %882 = vmatpush1.xpose.msra.mxu0 0.0
    %883 = vmatprep.subr.mxu0 0.0
    %884 = vmatpush1.xpose.msra.mxu0 0.0
    %885 = vmatprep.subr.mxu0 0.0
    %886 = vmatpush1.xpose.msra.mxu0 0.0
    %887 = vmatprep.subr.mxu0 0.0
    %888 = vmatpush1.xpose.msra.mxu0 0.0
    %889 = vmatprep.mubr.f32.mxu0 0.0
    %890 = vmatmul.mubr.f32.gmra.mrb[0].mxu0 %v817
    %v891 = vpop.f32.mrb[0].mxu0
    %v892 = vadd.f32 %v201, %v891
    %v893 = vpop.f32.mrb[0].mxu0
    %894 = vmatprep.mubr.f32.mxu0 0.0
    %895 = vmatmul.mubr.f32.gmra.mrb[0].mxu0 %v819
    %v896 = vpop.f32.mrb[0].mxu0
    %v897 = vadd.f32 %v202, %v896
    %v898 = vpop.f32.mrb[0].mxu0
    %899 = vdwg.mxu0
    %vm900 = vcmask 72704
    %v901 = vsel %vm900, %v283, -inf
    %902 = vmax.xlane.f32.xlu0 %v901
    %v903 = vpop.xlane.xlu0 %902
    %vm904 = vcmask 65536
    %v905 = vsel %vm904, %v288, -inf
    %906 = vmax.xlane.f32.xlu0 %v905
    %v907 = vpop.xlane.xlu0 %906
    %v908 = vsel %vm900, %v370, -inf
    %909 = vmax.xlane.f32.xlu0 %v908
    %v910 = vpop.xlane.xlu0 %909
    %v911 = vsel %vm904, %v375, -inf
    %912 = vmax.xlane.f32.xlu0 %v911
    %v913 = vpop.xlane.xlu0 %912
    %v914 = vsel %vm900, %v457, -inf
    %915 = vmax.xlane.f32.xlu0 %v914
    %v916 = vpop.xlane.xlu0 %915
    %v917 = vsel %vm904, %v462, -inf
    %918 = vmax.xlane.f32.xlu0 %v917
    %v919 = vpop.xlane.xlu0 %918
    %v920 = vsel %vm900, %v544, -inf
    %921 = vmax.xlane.f32.xlu0 %v920
    %v922 = vpop.xlane.xlu0 %921
    %v923 = vsel %vm904, %v549, -inf
    %924 = vmax.xlane.f32.xlu0 %v923
    %v925 = vpop.xlane.xlu0 %924
    %v926 = vsel %vm900, %v631, -inf
    %927 = vmax.xlane.f32.xlu0 %v926
    %v928 = vpop.xlane.xlu0 %927
    %v929 = vsel %vm904, %v636, -inf
    %930 = vmax.xlane.f32.xlu0 %v929
    %v931 = vpop.xlane.xlu0 %930
    %v932 = vsel %vm900, %v718, -inf
    %933 = vmax.xlane.f32.xlu0 %v932
    %v934 = vpop.xlane.xlu0 %933
    %v935 = vsel %vm904, %v723, -inf
    %936 = vmax.xlane.f32.xlu0 %v935
    %v937 = vpop.xlane.xlu0 %936
    %v938 = vsel %vm900, %v805, -inf
    %939 = vmax.xlane.f32.xlu0 %v938
    %v940 = vpop.xlane.xlu0 %939
    %v941 = vsel %vm904, %v810, -inf
    %942 = vmax.xlane.f32.xlu0 %v941
    %v943 = vpop.xlane.xlu0 %942
    %v944 = vsel %vm900, %v892, -inf
    %945 = vmax.xlane.f32.xlu0 %v944
    %v946 = vpop.xlane.xlu0 %945
    %v947 = vsel %vm904, %v897, -inf
    %948 = vmax.xlane.f32.xlu0 %v947
    %v949 = vpop.xlane.xlu0 %948
    %v950 = vsub.f32 %v283, %v903
    %v951 = vsub.f32 %v288, %v907
    %v952 = vsub.f32 %v370, %v910
    %v953 = vsub.f32 %v375, %v913
    %v954 = vsub.f32 %v457, %v916
    %v955 = vsub.f32 %v462, %v919
    %v956 = vsub.f32 %v544, %v922
    %v957 = vsub.f32 %v549, %v925
    %v958 = vsub.f32 %v631, %v928
    %v959 = vsub.f32 %v636, %v931
    %v960 = vsub.f32 %v718, %v934
    %v961 = vsub.f32 %v723, %v937
    %v962 = vsub.f32 %v805, %v940
    %v963 = vsub.f32 %v810, %v943
    %v964 = vsub.f32 %v892, %v946
    %v965 = vsub.f32 %v897, %v949
    %v966 = vmul.f32 %v950, 1.442695
    %v967 = vpow.pop %v966
    %v968 = vmul.f32 %v951, 1.442695
    %v969 = vpow.pop %v968
    %v970 = vmul.f32 %v952, 1.442695
    %v971 = vpow.pop %v970
    %v972 = vmul.f32 %v953, 1.442695
    %v973 = vpow.pop %v972
    %v974 = vmul.f32 %v954, 1.442695
    %v975 = vpow.pop %v974
    %v976 = vmul.f32 %v955, 1.442695
    %v977 = vpow.pop %v976
    %v978 = vmul.f32 %v956, 1.442695
    %v979 = vpow.pop %v978
    %v980 = vmul.f32 %v957, 1.442695
    %v981 = vpow.pop %v980
    %v982 = vmul.f32 %v958, 1.442695
    %v983 = vpow.pop %v982
    %v984 = vmul.f32 %v959, 1.442695
    %v985 = vpow.pop %v984
    %v986 = vmul.f32 %v960, 1.442695
    %v987 = vpow.pop %v986
    %v988 = vmul.f32 %v961, 1.442695
    %v989 = vpow.pop %v988
    %v990 = vmul.f32 %v962, 1.442695
    %v991 = vpow.pop %v990
    %v992 = vmul.f32 %v963, 1.442695
    %v993 = vpow.pop %v992
    %v994 = vmul.f32 %v964, 1.442695
    %v995 = vpow.pop %v994
    %v996 = vmul.f32 %v965, 1.442695
    %v997 = vpow.pop %v996
    %v998 = vsel %vm900, %v967, 0.0
    %999 = vadd.xlane.f32.xlu0 %v998
    %v1000 = vpop.xlane.xlu0 %999
    %v1001 = vsel %vm904, %v969, 0.0
    %1002 = vadd.xlane.f32.xlu0 %v1001
    %v1003 = vpop.xlane.xlu0 %1002
    %v1004 = vsel %vm900, %v971, 0.0
    %1005 = vadd.xlane.f32.xlu0 %v1004
    %v1006 = vpop.xlane.xlu0 %1005
    %v1007 = vsel %vm904, %v973, 0.0
    %1008 = vadd.xlane.f32.xlu0 %v1007
    %v1009 = vpop.xlane.xlu0 %1008
    %v1010 = vsel %vm900, %v975, 0.0
    %1011 = vadd.xlane.f32.xlu0 %v1010
    %v1012 = vpop.xlane.xlu0 %1011
    %v1013 = vsel %vm904, %v977, 0.0
    %1014 = vadd.xlane.f32.xlu0 %v1013
    %v1015 = vpop.xlane.xlu0 %1014
    %v1016 = vsel %vm900, %v979, 0.0
    %1017 = vadd.xlane.f32.xlu0 %v1016
    %v1018 = vpop.xlane.xlu0 %1017
    %v1019 = vsel %vm904, %v981, 0.0
    %1020 = vadd.xlane.f32.xlu0 %v1019
    %v1021 = vpop.xlane.xlu0 %1020
    %v1022 = vsel %vm900, %v983, 0.0
    %1023 = vadd.xlane.f32.xlu0 %v1022
    %v1024 = vpop.xlane.xlu0 %1023
    %v1025 = vsel %vm904, %v985, 0.0
    %1026 = vadd.xlane.f32.xlu0 %v1025
    %v1027 = vpop.xlane.xlu0 %1026
    %v1028 = vsel %vm900, %v987, 0.0
    %1029 = vadd.xlane.f32.xlu0 %v1028
    %v1030 = vpop.xlane.xlu0 %1029
    %v1031 = vsel %vm904, %v989, 0.0
    %1032 = vadd.xlane.f32.xlu0 %v1031
    %v1033 = vpop.xlane.xlu0 %1032
    %v1034 = vsel %vm900, %v991, 0.0
    %1035 = vadd.xlane.f32.xlu0 %v1034
    %v1036 = vpop.xlane.xlu0 %1035
    %v1037 = vsel %vm904, %v993, 0.0
    %1038 = vadd.xlane.f32.xlu0 %v1037
    %v1039 = vpop.xlane.xlu0 %1038
    %v1040 = vsel %vm900, %v995, 0.0
    %1041 = vadd.xlane.f32.xlu0 %v1040
    %v1042 = vpop.xlane.xlu0 %1041
    %v1043 = vsel %vm904, %v997, 0.0
    %1044 = vadd.xlane.f32.xlu0 %v1043
    %v1045 = vpop.xlane.xlu0 %1044
    %v1046 = vrcp.pop %v1000
    %v1047 = vrcp.pop %v1003
    %v1048 = vrcp.pop %v1006
    %v1049 = vrcp.pop %v1009
    %v1050 = vrcp.pop %v1012
    %v1051 = vrcp.pop %v1015
    %v1052 = vrcp.pop %v1018
    %v1053 = vrcp.pop %v1021
    %v1054 = vrcp.pop %v1024
    %v1055 = vrcp.pop %v1027
    %v1056 = vrcp.pop %v1030
    %v1057 = vrcp.pop %v1033
    %v1058 = vrcp.pop %v1036
    %v1059 = vrcp.pop %v1039
    %v1060 = vrcp.pop %v1042
    %v1061 = vrcp.pop %v1045
    %v1062 = vmul.f32 %v967, %v1046
    %v1063 = vmul.f32 %v969, %v1047
    %v1064 = vmul.f32 %v971, %v1048
    %v1065 = vmul.f32 %v973, %v1049
    %v1066 = vmul.f32 %v975, %v1050
    %v1067 = vmul.f32 %v977, %v1051
    %v1068 = vmul.f32 %v979, %v1052
    %v1069 = vmul.f32 %v981, %v1053
    %v1070 = vmul.f32 %v983, %v1054
    %v1071 = vmul.f32 %v985, %v1055
    %v1072 = vmul.f32 %v987, %v1056
    %v1073 = vmul.f32 %v989, %v1057
    %v1074 = vmul.f32 %v991, %v1058
    %v1075 = vmul.f32 %v993, %v1059
    %v1076 = vmul.f32 %v995, %v1060
    %v1077 = vmul.f32 %v997, %v1061
    %1078 = vst.msk [vmem:[%s5] sm:$0xff] %vm900, %v1062
    %1079 = vst.msk [vmem:[%s5 + $0x8] sm:$0x1] %vm904, %v1063
    %1080 = vst.msk [vmem:[%s5 + $0x10] sm:$0xff] %vm900, %v1064
    %1081 = vst.msk [vmem:[%s5 + $0x18] sm:$0x1] %vm904, %v1065
    %1082 = vst.msk [vmem:[%s5 + $0x20] sm:$0xff] %vm900, %v1066
    %1083 = vst.msk [vmem:[%s5 + $0x28] sm:$0x1] %vm904, %v1067
    %1084 = vst.msk [vmem:[%s5 + $0x30] sm:$0xff] %vm900, %v1068
    %1085 = vst.msk [vmem:[%s5 + $0x38] sm:$0x1] %vm904, %v1069
    %1086 = vst.msk [vmem:[%s5 + $0x40] sm:$0xff] %vm900, %v1070
    %1087 = vst.msk [vmem:[%s5 + $0x48] sm:$0x1] %vm904, %v1071
    %1088 = vst.msk [vmem:[%s5 + $0x50] sm:$0xff] %vm900, %v1072
    %1089 = vst.msk [vmem:[%s5 + $0x58] sm:$0x1] %vm904, %v1073
    %1090 = vst.msk [vmem:[%s5 + $0x60] sm:$0xff] %vm900, %v1074
    %1091 = vst.msk [vmem:[%s5 + $0x68] sm:$0x1] %vm904, %v1075
    %1092 = vst.msk [vmem:[%s5 + $0x70] sm:$0xff] %vm900, %v1076
    %1093 = vst.msk [vmem:[%s5 + $0x78] sm:$0x1] %vm904, %v1077
    %1094 = vrot.lane.b32.xlu0 %v150, 64
    %v1095 = vpop.permute.xlu0 %1094
    %1096 = vrot.lane.b32.xlu0 %v155, 64
    %v1097 = vpop.permute.xlu0 %1096
    %v1100 = vsel %vm900, %v1062, 0
    %v1103 = vsel %vm900, %v1063, 0
    %vm1105 = vcmask 1040384
    %v1106 = vsel %vm1105, %v1097, 0
    %1108 = vmatprep.subr.mxu0 0.0
    %1109 = vmatpush1.msra.mxu0 %v1095
    %1110 = vmatprep.subr.mxu0 0.0
    %1111 = vmatpush1.msra.mxu0 %v1106
    %1112 = vmatprep.subr.mxu0 0.0
    %1113 = vmatpush1.msra.mxu0 0.0
    %1114 = vmatprep.subr.mxu0 0.0
    %1115 = vmatpush1.msra.mxu0 0.0
    %1116 = vmatprep.subr.mxu0 0.0
    %1117 = vmatpush1.msra.mxu0 0.0
    %1118 = vmatprep.subr.mxu0 0.0
    %1119 = vmatpush1.msra.mxu0 0.0
    %1120 = vmatprep.subr.mxu0 0.0
    %1121 = vmatpush1.msra.mxu0 0.0
    %1122 = vmatprep.subr.mxu0 0.0
    %1123 = vmatpush1.msra.mxu0 0.0
    %1124 = vmatprep.subr.mxu0 0.0
    %1125 = vmatpush1.msra.mxu0 0.0
    %1126 = vmatprep.subr.mxu0 0.0
    %1127 = vmatpush1.msra.mxu0 0.0
    %1128 = vmatprep.subr.mxu0 0.0
    %1129 = vmatpush1.msra.mxu0 0.0
    %1130 = vmatprep.subr.mxu0 0.0
    %1131 = vmatpush1.msra.mxu0 0.0
    %1132 = vmatprep.subr.mxu0 0.0
    %1133 = vmatpush1.msra.mxu0 0.0
    %1134 = vmatprep.subr.mxu0 0.0
    %1135 = vmatpush1.msra.mxu0 0.0
    %1136 = vmatprep.subr.mxu0 0.0
    %1137 = vmatpush1.msra.mxu0 0.0
    %1138 = vmatprep.subr.mxu0 0.0
    %1139 = vmatpush1.msra.mxu0 0.0
    %1140 = vmatprep.subr.mxu0 0.0
    %1141 = vmatpush1.msra.mxu0 0.0
    %1142 = vmatprep.subr.mxu0 0.0
    %1143 = vmatpush1.msra.mxu0 0.0
    %1144 = vmatprep.subr.mxu0 0.0
    %1145 = vmatpush1.msra.mxu0 0.0
    %1146 = vmatprep.subr.mxu0 0.0
    %1147 = vmatpush1.msra.mxu0 0.0
    %1148 = vmatprep.subr.mxu0 0.0
    %1149 = vmatpush1.msra.mxu0 0.0
    %1150 = vmatprep.subr.mxu0 0.0
    %1151 = vmatpush1.msra.mxu0 0.0
    %1152 = vmatprep.subr.mxu0 0.0
    %1153 = vmatpush1.msra.mxu0 0.0
    %1154 = vmatprep.subr.mxu0 0.0
    %1155 = vmatpush1.msra.mxu0 0.0
    %1156 = vmatprep.subr.mxu0 0.0
    %1157 = vmatpush1.msra.mxu0 0.0
    %1158 = vmatprep.subr.mxu0 0.0
    %1159 = vmatpush1.msra.mxu0 0.0
    %1160 = vmatprep.subr.mxu0 0.0
    %1161 = vmatpush1.msra.mxu0 0.0
    %1162 = vmatprep.subr.mxu0 0.0
    %1163 = vmatpush1.msra.mxu0 0.0
    %1164 = vmatprep.subr.mxu0 0.0
    %1165 = vmatpush1.msra.mxu0 0.0
    %1166 = vmatprep.subr.mxu0 0.0
    %1167 = vmatpush1.msra.mxu0 0.0
    %1168 = vmatprep.subr.mxu0 0.0
    %1169 = vmatpush1.msra.mxu0 0.0
    %1170 = vmatprep.subr.mxu0 0.0
    %1171 = vmatpush1.msra.mxu0 0.0
    %1172 = vmatprep.mubr.f32.mxu0 0.0
    %1173 = vmatmul.mubr.f32.gmra.mrb[0].mxu0 %v1100
    %v1174 = vpop.f32.mrb[0].mxu0
    %v1175 = vadd.f32 0.0, %v1174
    %v1176 = vpop.f32.mrb[0].mxu0
    %1177 = vmatprep.mubr.f32.mxu0 0.0
    %1178 = vmatmul.mubr.f32.gmra.mrb[0].mxu0 %v1103
    %v1179 = vpop.f32.mrb[0].mxu0
    %v1180 = vadd.f32 0.0, %v1179
    %v1181 = vpop.f32.mrb[0].mxu0
    %1182 = vdwg.mxu0
    %1183 = vrot.lane.b32.xlu0 %v166, 64
    %v1184 = vpop.permute.xlu0 %1183
    %1185 = vrot.lane.b32.xlu0 %v168, 64
    %v1186 = vpop.permute.xlu0 %1185
    %v1189 = vsel %vm900, %v1064, 0
    %v1192 = vsel %vm900, %v1065, 0
    %v1194 = vsel %vm1105, %v1186, 0
    %1196 = vmatprep.subr.mxu0 0.0
    %1197 = vmatpush1.msra.mxu0 %v1184
    %1198 = vmatprep.subr.mxu0 0.0
    %1199 = vmatpush1.msra.mxu0 %v1194
    %1200 = vmatprep.subr.mxu0 0.0
    %1201 = vmatpush1.msra.mxu0 0.0
    %1202 = vmatprep.subr.mxu0 0.0
    %1203 = vmatpush1.msra.mxu0 0.0
    %1204 = vmatprep.subr.mxu0 0.0
    %1205 = vmatpush1.msra.mxu0 0.0
    %1206 = vmatprep.subr.mxu0 0.0
    %1207 = vmatpush1.msra.mxu0 0.0
    %1208 = vmatprep.subr.mxu0 0.0
    %1209 = vmatpush1.msra.mxu0 0.0
    %1210 = vmatprep.subr.mxu0 0.0
    %1211 = vmatpush1.msra.mxu0 0.0
    %1212 = vmatprep.subr.mxu0 0.0
    %1213 = vmatpush1.msra.mxu0 0.0
    %1214 = vmatprep.subr.mxu0 0.0
    %1215 = vmatpush1.msra.mxu0 0.0
    %1216 = vmatprep.subr.mxu0 0.0
    %1217 = vmatpush1.msra.mxu0 0.0
    %1218 = vmatprep.subr.mxu0 0.0
    %1219 = vmatpush1.msra.mxu0 0.0
    %1220 = vmatprep.subr.mxu0 0.0
    %1221 = vmatpush1.msra.mxu0 0.0
    %1222 = vmatprep.subr.mxu0 0.0
    %1223 = vmatpush1.msra.mxu0 0.0
    %1224 = vmatprep.subr.mxu0 0.0
    %1225 = vmatpush1.msra.mxu0 0.0
    %1226 = vmatprep.subr.mxu0 0.0
    %1227 = vmatpush1.msra.mxu0 0.0
    %1228 = vmatprep.subr.mxu0 0.0
    %1229 = vmatpush1.msra.mxu0 0.0
    %1230 = vmatprep.subr.mxu0 0.0
    %1231 = vmatpush1.msra.mxu0 0.0
    %1232 = vmatprep.subr.mxu0 0.0
    %1233 = vmatpush1.msra.mxu0 0.0
    %1234 = vmatprep.subr.mxu0 0.0
    %1235 = vmatpush1.msra.mxu0 0.0
    %1236 = vmatprep.subr.mxu0 0.0
    %1237 = vmatpush1.msra.mxu0 0.0
    %1238 = vmatprep.subr.mxu0 0.0
    %1239 = vmatpush1.msra.mxu0 0.0
    %1240 = vmatprep.subr.mxu0 0.0
    %1241 = vmatpush1.msra.mxu0 0.0
    %1242 = vmatprep.subr.mxu0 0.0
    %1243 = vmatpush1.msra.mxu0 0.0
    %1244 = vmatprep.subr.mxu0 0.0
    %1245 = vmatpush1.msra.mxu0 0.0
    %1246 = vmatprep.subr.mxu0 0.0
    %1247 = vmatpush1.msra.mxu0 0.0
    %1248 = vmatprep.subr.mxu0 0.0
    %1249 = vmatpush1.msra.mxu0 0.0
    %1250 = vmatprep.subr.mxu0 0.0
    %1251 = vmatpush1.msra.mxu0 0.0
    %1252 = vmatprep.subr.mxu0 0.0
    %1253 = vmatpush1.msra.mxu0 0.0
    %1254 = vmatprep.subr.mxu0 0.0
    %1255 = vmatpush1.msra.mxu0 0.0
    %1256 = vmatprep.subr.mxu0 0.0
    %1257 = vmatpush1.msra.mxu0 0.0
    %1258 = vmatprep.subr.mxu0 0.0
    %1259 = vmatpush1.msra.mxu0 0.0
    %1260 = vmatprep.mubr.f32.mxu0 0.0
    %1261 = vmatmul.mubr.f32.gmra.mrb[0].mxu0 %v1189
    %v1262 = vpop.f32.mrb[0].mxu0
    %v1263 = vadd.f32 0.0, %v1262
    %v1264 = vpop.f32.mrb[0].mxu0
    %1265 = vmatprep.mubr.f32.mxu0 0.0
    %1266 = vmatmul.mubr.f32.gmra.mrb[0].mxu0 %v1192
    %v1267 = vpop.f32.mrb[0].mxu0
    %v1268 = vadd.f32 0.0, %v1267
    %v1269 = vpop.f32.mrb[0].mxu0
    %1270 = vdwg.mxu0
    %1271 = vrot.lane.b32.xlu0 %v170, 64
    %v1272 = vpop.permute.xlu0 %1271
    %1273 = vrot.lane.b32.xlu0 %v172, 64
    %v1274 = vpop.permute.xlu0 %1273
    %v1277 = vsel %vm900, %v1066, 0
    %v1280 = vsel %vm900, %v1067, 0
    %v1282 = vsel %vm1105, %v1274, 0
    %1284 = vmatprep.subr.mxu0 0.0
    %1285 = vmatpush1.msra.mxu0 %v1272
    %1286 = vmatprep.subr.mxu0 0.0
    %1287 = vmatpush1.msra.mxu0 %v1282
    %1288 = vmatprep.subr.mxu0 0.0
    %1289 = vmatpush1.msra.mxu0 0.0
    %1290 = vmatprep.subr.mxu0 0.0
    %1291 = vmatpush1.msra.mxu0 0.0
    %1292 = vmatprep.subr.mxu0 0.0
    %1293 = vmatpush1.msra.mxu0 0.0
    %1294 = vmatprep.subr.mxu0 0.0
    %1295 = vmatpush1.msra.mxu0 0.0
    %1296 = vmatprep.subr.mxu0 0.0
    %1297 = vmatpush1.msra.mxu0 0.0
    %1298 = vmatprep.subr.mxu0 0.0
    %1299 = vmatpush1.msra.mxu0 0.0
    %1300 = vmatprep.subr.mxu0 0.0
    %1301 = vmatpush1.msra.mxu0 0.0
    %1302 = vmatprep.subr.mxu0 0.0
    %1303 = vmatpush1.msra.mxu0 0.0
    %1304 = vmatprep.subr.mxu0 0.0
    %1305 = vmatpush1.msra.mxu0 0.0
    %1306 = vmatprep.subr.mxu0 0.0
    %1307 = vmatpush1.msra.mxu0 0.0
    %1308 = vmatprep.subr.mxu0 0.0
    %1309 = vmatpush1.msra.mxu0 0.0
    %1310 = vmatprep.subr.mxu0 0.0
    %1311 = vmatpush1.msra.mxu0 0.0
    %1312 = vmatprep.subr.mxu0 0.0
    %1313 = vmatpush1.msra.mxu0 0.0
    %1314 = vmatprep.subr.mxu0 0.0
    %1315 = vmatpush1.msra.mxu0 0.0
    %1316 = vmatprep.subr.mxu0 0.0
    %1317 = vmatpush1.msra.mxu0 0.0
    %1318 = vmatprep.subr.mxu0 0.0
    %1319 = vmatpush1.msra.mxu0 0.0
    %1320 = vmatprep.subr.mxu0 0.0
    %1321 = vmatpush1.msra.mxu0 0.0
    %1322 = vmatprep.subr.mxu0 0.0
    %1323 = vmatpush1.msra.mxu0 0.0
    %1324 = vmatprep.subr.mxu0 0.0
    %1325 = vmatpush1.msra.mxu0 0.0
    %1326 = vmatprep.subr.mxu0 0.0
    %1327 = vmatpush1.msra.mxu0 0.0
    %1328 = vmatprep.subr.mxu0 0.0
    %1329 = vmatpush1.msra.mxu0 0.0
    %1330 = vmatprep.subr.mxu0 0.0
    %1331 = vmatpush1.msra.mxu0 0.0
    %1332 = vmatprep.subr.mxu0 0.0
    %1333 = vmatpush1.msra.mxu0 0.0
    %1334 = vmatprep.subr.mxu0 0.0
    %1335 = vmatpush1.msra.mxu0 0.0
    %1336 = vmatprep.subr.mxu0 0.0
    %1337 = vmatpush1.msra.mxu0 0.0
    %1338 = vmatprep.subr.mxu0 0.0
    %1339 = vmatpush1.msra.mxu0 0.0
    %1340 = vmatprep.subr.mxu0 0.0
    %1341 = vmatpush1.msra.mxu0 0.0
    %1342 = vmatprep.subr.mxu0 0.0
    %1343 = vmatpush1.msra.mxu0 0.0
    %1344 = vmatprep.subr.mxu0 0.0
    %1345 = vmatpush1.msra.mxu0 0.0
    %1346 = vmatprep.subr.mxu0 0.0
    %1347 = vmatpush1.msra.mxu0 0.0
    %1348 = vmatprep.mubr.f32.mxu0 0.0
    %1349 = vmatmul.mubr.f32.gmra.mrb[0].mxu0 %v1277
    %v1350 = vpop.f32.mrb[0].mxu0
    %v1351 = vadd.f32 0.0, %v1350
    %v1352 = vpop.f32.mrb[0].mxu0
    %1353 = vmatprep.mubr.f32.mxu0 0.0
    %1354 = vmatmul.mubr.f32.gmra.mrb[0].mxu0 %v1280
    %v1355 = vpop.f32.mrb[0].mxu0
    %v1356 = vadd.f32 0.0, %v1355
    %v1357 = vpop.f32.mrb[0].mxu0
    %1358 = vdwg.mxu0
    %1359 = vrot.lane.b32.xlu0 %v174, 64
    %v1360 = vpop.permute.xlu0 %1359
    %1361 = vrot.lane.b32.xlu0 %v176, 64
    %v1362 = vpop.permute.xlu0 %1361
    %v1365 = vsel %vm900, %v1068, 0
    %v1368 = vsel %vm900, %v1069, 0
    %v1370 = vsel %vm1105, %v1362, 0
    %1372 = vmatprep.subr.mxu0 0.0
    %1373 = vmatpush1.msra.mxu0 %v1360
    %1374 = vmatprep.subr.mxu0 0.0
    %1375 = vmatpush1.msra.mxu0 %v1370
    %1376 = vmatprep.subr.mxu0 0.0
    %1377 = vmatpush1.msra.mxu0 0.0
    %1378 = vmatprep.subr.mxu0 0.0
    %1379 = vmatpush1.msra.mxu0 0.0
    %1380 = vmatprep.subr.mxu0 0.0
    %1381 = vmatpush1.msra.mxu0 0.0
    %1382 = vmatprep.subr.mxu0 0.0
    %1383 = vmatpush1.msra.mxu0 0.0
    %1384 = vmatprep.subr.mxu0 0.0
    %1385 = vmatpush1.msra.mxu0 0.0
    %1386 = vmatprep.subr.mxu0 0.0
    %1387 = vmatpush1.msra.mxu0 0.0
    %1388 = vmatprep.subr.mxu0 0.0
    %1389 = vmatpush1.msra.mxu0 0.0
    %1390 = vmatprep.subr.mxu0 0.0
    %1391 = vmatpush1.msra.mxu0 0.0
    %1392 = vmatprep.subr.mxu0 0.0
    %1393 = vmatpush1.msra.mxu0 0.0
    %1394 = vmatprep.subr.mxu0 0.0
    %1395 = vmatpush1.msra.mxu0 0.0
    %1396 = vmatprep.subr.mxu0 0.0
    %1397 = vmatpush1.msra.mxu0 0.0
    %1398 = vmatprep.subr.mxu0 0.0
    %1399 = vmatpush1.msra.mxu0 0.0
    %1400 = vmatprep.subr.mxu0 0.0
    %1401 = vmatpush1.msra.mxu0 0.0
    %1402 = vmatprep.subr.mxu0 0.0
    %1403 = vmatpush1.msra.mxu0 0.0
    %1404 = vmatprep.subr.mxu0 0.0
    %1405 = vmatpush1.msra.mxu0 0.0
    %1406 = vmatprep.subr.mxu0 0.0
    %1407 = vmatpush1.msra.mxu0 0.0
    %1408 = vmatprep.subr.mxu0 0.0
    %1409 = vmatpush1.msra.mxu0 0.0
    %1410 = vmatprep.subr.mxu0 0.0
    %1411 = vmatpush1.msra.mxu0 0.0
    %1412 = vmatprep.subr.mxu0 0.0
    %1413 = vmatpush1.msra.mxu0 0.0
    %1414 = vmatprep.subr.mxu0 0.0
    %1415 = vmatpush1.msra.mxu0 0.0
    %1416 = vmatprep.subr.mxu0 0.0
    %1417 = vmatpush1.msra.mxu0 0.0
    %1418 = vmatprep.subr.mxu0 0.0
    %1419 = vmatpush1.msra.mxu0 0.0
    %1420 = vmatprep.subr.mxu0 0.0
    %1421 = vmatpush1.msra.mxu0 0.0
    %1422 = vmatprep.subr.mxu0 0.0
    %1423 = vmatpush1.msra.mxu0 0.0
    %1424 = vmatprep.subr.mxu0 0.0
    %1425 = vmatpush1.msra.mxu0 0.0
    %1426 = vmatprep.subr.mxu0 0.0
    %1427 = vmatpush1.msra.mxu0 0.0
    %1428 = vmatprep.subr.mxu0 0.0
    %1429 = vmatpush1.msra.mxu0 0.0
    %1430 = vmatprep.subr.mxu0 0.0
    %1431 = vmatpush1.msra.mxu0 0.0
    %1432 = vmatprep.subr.mxu0 0.0
    %1433 = vmatpush1.msra.mxu0 0.0
    %1434 = vmatprep.subr.mxu0 0.0
    %1435 = vmatpush1.msra.mxu0 0.0
    %1436 = vmatprep.mubr.f32.mxu0 0.0
    %1437 = vmatmul.mubr.f32.gmra.mrb[0].mxu0 %v1365
    %v1438 = vpop.f32.mrb[0].mxu0
    %v1439 = vadd.f32 0.0, %v1438
    %v1440 = vpop.f32.mrb[0].mxu0
    %1441 = vmatprep.mubr.f32.mxu0 0.0
    %1442 = vmatmul.mubr.f32.gmra.mrb[0].mxu0 %v1368
    %v1443 = vpop.f32.mrb[0].mxu0
    %v1444 = vadd.f32 0.0, %v1443
    %v1445 = vpop.f32.mrb[0].mxu0
    %1446 = vdwg.mxu0
    %1447 = vrot.lane.b32.xlu0 %v181, 64
    %v1448 = vpop.permute.xlu0 %1447
    %1449 = vrot.lane.b32.xlu0 %v180, 64
    %v1450 = vpop.permute.xlu0 %1449
    %v1453 = vsel %vm900, %v1070, 0
    %v1456 = vsel %vm900, %v1071, 0
    %v1458 = vsel %vm1105, %v1450, 0
    %1460 = vmatprep.subr.mxu0 0.0
    %1461 = vmatpush1.msra.mxu0 %v1448
    %1462 = vmatprep.subr.mxu0 0.0
    %1463 = vmatpush1.msra.mxu0 %v1458
    %1464 = vmatprep.subr.mxu0 0.0
    %1465 = vmatpush1.msra.mxu0 0.0
    %1466 = vmatprep.subr.mxu0 0.0
    %1467 = vmatpush1.msra.mxu0 0.0
    %1468 = vmatprep.subr.mxu0 0.0
    %1469 = vmatpush1.msra.mxu0 0.0
    %1470 = vmatprep.subr.mxu0 0.0
    %1471 = vmatpush1.msra.mxu0 0.0
    %1472 = vmatprep.subr.mxu0 0.0
    %1473 = vmatpush1.msra.mxu0 0.0
    %1474 = vmatprep.subr.mxu0 0.0
    %1475 = vmatpush1.msra.mxu0 0.0
    %1476 = vmatprep.subr.mxu0 0.0
    %1477 = vmatpush1.msra.mxu0 0.0
    %1478 = vmatprep.subr.mxu0 0.0
    %1479 = vmatpush1.msra.mxu0 0.0
    %1480 = vmatprep.subr.mxu0 0.0
    %1481 = vmatpush1.msra.mxu0 0.0
    %1482 = vmatprep.subr.mxu0 0.0
    %1483 = vmatpush1.msra.mxu0 0.0
    %1484 = vmatprep.subr.mxu0 0.0
    %1485 = vmatpush1.msra.mxu0 0.0
    %1486 = vmatprep.subr.mxu0 0.0
    %1487 = vmatpush1.msra.mxu0 0.0
    %1488 = vmatprep.subr.mxu0 0.0
    %1489 = vmatpush1.msra.mxu0 0.0
    %1490 = vmatprep.subr.mxu0 0.0
    %1491 = vmatpush1.msra.mxu0 0.0
    %1492 = vmatprep.subr.mxu0 0.0
    %1493 = vmatpush1.msra.mxu0 0.0
    %1494 = vmatprep.subr.mxu0 0.0
    %1495 = vmatpush1.msra.mxu0 0.0
    %1496 = vmatprep.subr.mxu0 0.0
    %1497 = vmatpush1.msra.mxu0 0.0
    %1498 = vmatprep.subr.mxu0 0.0
    %1499 = vmatpush1.msra.mxu0 0.0
    %1500 = vmatprep.subr.mxu0 0.0
    %1501 = vmatpush1.msra.mxu0 0.0
    %1502 = vmatprep.subr.mxu0 0.0
    %1503 = vmatpush1.msra.mxu0 0.0
    %1504 = vmatprep.subr.mxu0 0.0
    %1505 = vmatpush1.msra.mxu0 0.0
    %1506 = vmatprep.subr.mxu0 0.0
    %1507 = vmatpush1.msra.mxu0 0.0
    %1508 = vmatprep.subr.mxu0 0.0
    %1509 = vmatpush1.msra.mxu0 0.0
    %1510 = vmatprep.subr.mxu0 0.0
    %1511 = vmatpush1.msra.mxu0 0.0
    %1512 = vmatprep.subr.mxu0 0.0
    %1513 = vmatpush1.msra.mxu0 0.0
    %1514 = vmatprep.subr.mxu0 0.0
    %1515 = vmatpush1.msra.mxu0 0.0
    %1516 = vmatprep.subr.mxu0 0.0
    %1517 = vmatpush1.msra.mxu0 0.0
    %1518 = vmatprep.subr.mxu0 0.0
    %1519 = vmatpush1.msra.mxu0 0.0
    %1520 = vmatprep.subr.mxu0 0.0
    %1521 = vmatpush1.msra.mxu0 0.0
    %1522 = vmatprep.subr.mxu0 0.0
    %1523 = vmatpush1.msra.mxu0 0.0
    %1524 = vmatprep.mubr.f32.mxu0 0.0
    %1525 = vmatmul.mubr.f32.gmra.mrb[0].mxu0 %v1453
    %v1526 = vpop.f32.mrb[0].mxu0
    %v1527 = vadd.f32 0.0, %v1526
    %v1528 = vpop.f32.mrb[0].mxu0
    %1529 = vmatprep.mubr.f32.mxu0 0.0
    %1530 = vmatmul.mubr.f32.gmra.mrb[0].mxu0 %v1456
    %v1531 = vpop.f32.mrb[0].mxu0
    %v1532 = vadd.f32 0.0, %v1531
    %v1533 = vpop.f32.mrb[0].mxu0
    %1534 = vdwg.mxu0
    %1535 = vrot.lane.b32.xlu0 %v183, 64
    %v1536 = vpop.permute.xlu0 %1535
    %1537 = vrot.lane.b32.xlu0 %v185, 64
    %v1538 = vpop.permute.xlu0 %1537
    %v1541 = vsel %vm900, %v1072, 0
    %v1544 = vsel %vm900, %v1073, 0
    %v1546 = vsel %vm1105, %v1538, 0
    %1548 = vmatprep.subr.mxu0 0.0
    %1549 = vmatpush1.msra.mxu0 %v1536
    %1550 = vmatprep.subr.mxu0 0.0
    %1551 = vmatpush1.msra.mxu0 %v1546
    %1552 = vmatprep.subr.mxu0 0.0
    %1553 = vmatpush1.msra.mxu0 0.0
    %1554 = vmatprep.subr.mxu0 0.0
    %1555 = vmatpush1.msra.mxu0 0.0
    %1556 = vmatprep.subr.mxu0 0.0
    %1557 = vmatpush1.msra.mxu0 0.0
    %1558 = vmatprep.subr.mxu0 0.0
    %1559 = vmatpush1.msra.mxu0 0.0
    %1560 = vmatprep.subr.mxu0 0.0
    %1561 = vmatpush1.msra.mxu0 0.0
    %1562 = vmatprep.subr.mxu0 0.0
    %1563 = vmatpush1.msra.mxu0 0.0
    %1564 = vmatprep.subr.mxu0 0.0
    %1565 = vmatpush1.msra.mxu0 0.0
    %1566 = vmatprep.subr.mxu0 0.0
    %1567 = vmatpush1.msra.mxu0 0.0
    %1568 = vmatprep.subr.mxu0 0.0
    %1569 = vmatpush1.msra.mxu0 0.0
    %1570 = vmatprep.subr.mxu0 0.0
    %1571 = vmatpush1.msra.mxu0 0.0
    %1572 = vmatprep.subr.mxu0 0.0
    %1573 = vmatpush1.msra.mxu0 0.0
    %1574 = vmatprep.subr.mxu0 0.0
    %1575 = vmatpush1.msra.mxu0 0.0
    %1576 = vmatprep.subr.mxu0 0.0
    %1577 = vmatpush1.msra.mxu0 0.0
    %1578 = vmatprep.subr.mxu0 0.0
    %1579 = vmatpush1.msra.mxu0 0.0
    %1580 = vmatprep.subr.mxu0 0.0
    %1581 = vmatpush1.msra.mxu0 0.0
    %1582 = vmatprep.subr.mxu0 0.0
    %1583 = vmatpush1.msra.mxu0 0.0
    %1584 = vmatprep.subr.mxu0 0.0
    %1585 = vmatpush1.msra.mxu0 0.0
    %1586 = vmatprep.subr.mxu0 0.0
    %1587 = vmatpush1.msra.mxu0 0.0
    %1588 = vmatprep.subr.mxu0 0.0
    %1589 = vmatpush1.msra.mxu0 0.0
    %1590 = vmatprep.subr.mxu0 0.0
    %1591 = vmatpush1.msra.mxu0 0.0
    %1592 = vmatprep.subr.mxu0 0.0
    %1593 = vmatpush1.msra.mxu0 0.0
    %1594 = vmatprep.subr.mxu0 0.0
    %1595 = vmatpush1.msra.mxu0 0.0
    %1596 = vmatprep.subr.mxu0 0.0
    %1597 = vmatpush1.msra.mxu0 0.0
    %1598 = vmatprep.subr.mxu0 0.0
    %1599 = vmatpush1.msra.mxu0 0.0
    %1600 = vmatprep.subr.mxu0 0.0
    %1601 = vmatpush1.msra.mxu0 0.0
    %1602 = vmatprep.subr.mxu0 0.0
    %1603 = vmatpush1.msra.mxu0 0.0
    %1604 = vmatprep.subr.mxu0 0.0
    %1605 = vmatpush1.msra.mxu0 0.0
    %1606 = vmatprep.subr.mxu0 0.0
    %1607 = vmatpush1.msra.mxu0 0.0
    %1608 = vmatprep.subr.mxu0 0.0
    %1609 = vmatpush1.msra.mxu0 0.0
    %1610 = vmatprep.subr.mxu0 0.0
    %1611 = vmatpush1.msra.mxu0 0.0
    %1612 = vmatprep.mubr.f32.mxu0 0.0
    %1613 = vmatmul.mubr.f32.gmra.mrb[0].mxu0 %v1541
    %v1614 = vpop.f32.mrb[0].mxu0
    %v1615 = vadd.f32 0.0, %v1614
    %v1616 = vpop.f32.mrb[0].mxu0
    %1617 = vmatprep.mubr.f32.mxu0 0.0
    %1618 = vmatmul.mubr.f32.gmra.mrb[0].mxu0 %v1544
    %v1619 = vpop.f32.mrb[0].mxu0
    %v1620 = vadd.f32 0.0, %v1619
    %v1621 = vpop.f32.mrb[0].mxu0
    %1622 = vdwg.mxu0
    %1623 = vrot.lane.b32.xlu0 %v187, 64
    %v1624 = vpop.permute.xlu0 %1623
    %1625 = vrot.lane.b32.xlu0 %v189, 64
    %v1626 = vpop.permute.xlu0 %1625
    %v1629 = vsel %vm900, %v1074, 0
    %v1632 = vsel %vm900, %v1075, 0
    %v1634 = vsel %vm1105, %v1626, 0
    %1636 = vmatprep.subr.mxu0 0.0
    %1637 = vmatpush1.msra.mxu0 %v1624
    %1638 = vmatprep.subr.mxu0 0.0
    %1639 = vmatpush1.msra.mxu0 %v1634
    %1640 = vmatprep.subr.mxu0 0.0
    %1641 = vmatpush1.msra.mxu0 0.0
    %1642 = vmatprep.subr.mxu0 0.0
    %1643 = vmatpush1.msra.mxu0 0.0
    %1644 = vmatprep.subr.mxu0 0.0
    %1645 = vmatpush1.msra.mxu0 0.0
    %1646 = vmatprep.subr.mxu0 0.0
    %1647 = vmatpush1.msra.mxu0 0.0
    %1648 = vmatprep.subr.mxu0 0.0
    %1649 = vmatpush1.msra.mxu0 0.0
    %1650 = vmatprep.subr.mxu0 0.0
    %1651 = vmatpush1.msra.mxu0 0.0
    %1652 = vmatprep.subr.mxu0 0.0
    %1653 = vmatpush1.msra.mxu0 0.0
    %1654 = vmatprep.subr.mxu0 0.0
    %1655 = vmatpush1.msra.mxu0 0.0
    %1656 = vmatprep.subr.mxu0 0.0
    %1657 = vmatpush1.msra.mxu0 0.0
    %1658 = vmatprep.subr.mxu0 0.0
    %1659 = vmatpush1.msra.mxu0 0.0
    %1660 = vmatprep.subr.mxu0 0.0
    %1661 = vmatpush1.msra.mxu0 0.0
    %1662 = vmatprep.subr.mxu0 0.0
    %1663 = vmatpush1.msra.mxu0 0.0
    %1664 = vmatprep.subr.mxu0 0.0
    %1665 = vmatpush1.msra.mxu0 0.0
    %1666 = vmatprep.subr.mxu0 0.0
    %1667 = vmatpush1.msra.mxu0 0.0
    %1668 = vmatprep.subr.mxu0 0.0
    %1669 = vmatpush1.msra.mxu0 0.0
    %1670 = vmatprep.subr.mxu0 0.0
    %1671 = vmatpush1.msra.mxu0 0.0
    %1672 = vmatprep.subr.mxu0 0.0
    %1673 = vmatpush1.msra.mxu0 0.0
    %1674 = vmatprep.subr.mxu0 0.0
    %1675 = vmatpush1.msra.mxu0 0.0
    %1676 = vmatprep.subr.mxu0 0.0
    %1677 = vmatpush1.msra.mxu0 0.0
    %1678 = vmatprep.subr.mxu0 0.0
    %1679 = vmatpush1.msra.mxu0 0.0
    %1680 = vmatprep.subr.mxu0 0.0
    %1681 = vmatpush1.msra.mxu0 0.0
    %1682 = vmatprep.subr.mxu0 0.0
    %1683 = vmatpush1.msra.mxu0 0.0
    %1684 = vmatprep.subr.mxu0 0.0
    %1685 = vmatpush1.msra.mxu0 0.0
    %1686 = vmatprep.subr.mxu0 0.0
    %1687 = vmatpush1.msra.mxu0 0.0
    %1688 = vmatprep.subr.mxu0 0.0
    %1689 = vmatpush1.msra.mxu0 0.0
    %1690 = vmatprep.subr.mxu0 0.0
    %1691 = vmatpush1.msra.mxu0 0.0
    %1692 = vmatprep.subr.mxu0 0.0
    %1693 = vmatpush1.msra.mxu0 0.0
    %1694 = vmatprep.subr.mxu0 0.0
    %1695 = vmatpush1.msra.mxu0 0.0
    %1696 = vmatprep.subr.mxu0 0.0
    %1697 = vmatpush1.msra.mxu0 0.0
    %1698 = vmatprep.subr.mxu0 0.0
    %1699 = vmatpush1.msra.mxu0 0.0
    %1700 = vmatprep.mubr.f32.mxu0 0.0
    %1701 = vmatmul.mubr.f32.gmra.mrb[0].mxu0 %v1629
    %v1702 = vpop.f32.mrb[0].mxu0
    %v1703 = vadd.f32 0.0, %v1702
    %v1704 = vpop.f32.mrb[0].mxu0
    %1705 = vmatprep.mubr.f32.mxu0 0.0
    %1706 = vmatmul.mubr.f32.gmra.mrb[0].mxu0 %v1632
    %v1707 = vpop.f32.mrb[0].mxu0
    %v1708 = vadd.f32 0.0, %v1707
    %v1709 = vpop.f32.mrb[0].mxu0
    %1710 = vdwg.mxu0
    %1711 = vrot.lane.b32.xlu0 %v191, 64
    %v1712 = vpop.permute.xlu0 %1711
    %1713 = vrot.lane.b32.xlu0 %v193, 64
    %v1714 = vpop.permute.xlu0 %1713
    %v1717 = vsel %vm900, %v1076, 0
    %v1720 = vsel %vm900, %v1077, 0
    %v1722 = vsel %vm1105, %v1714, 0
    %1724 = vmatprep.subr.mxu0 0.0
    %1725 = vmatpush1.msra.mxu0 %v1712
    %1726 = vmatprep.subr.mxu0 0.0
    %1727 = vmatpush1.msra.mxu0 %v1722
    %1728 = vmatprep.subr.mxu0 0.0
    %1729 = vmatpush1.msra.mxu0 0.0
    %1730 = vmatprep.subr.mxu0 0.0
    %1731 = vmatpush1.msra.mxu0 0.0
    %1732 = vmatprep.subr.mxu0 0.0
    %1733 = vmatpush1.msra.mxu0 0.0
    %1734 = vmatprep.subr.mxu0 0.0
    %1735 = vmatpush1.msra.mxu0 0.0
    %1736 = vmatprep.subr.mxu0 0.0
    %1737 = vmatpush1.msra.mxu0 0.0
    %1738 = vmatprep.subr.mxu0 0.0
    %1739 = vmatpush1.msra.mxu0 0.0
    %1740 = vmatprep.subr.mxu0 0.0
    %1741 = vmatpush1.msra.mxu0 0.0
    %1742 = vmatprep.subr.mxu0 0.0
    %1743 = vmatpush1.msra.mxu0 0.0
    %1744 = vmatprep.subr.mxu0 0.0
    %1745 = vmatpush1.msra.mxu0 0.0
    %1746 = vmatprep.subr.mxu0 0.0
    %1747 = vmatpush1.msra.mxu0 0.0
    %1748 = vmatprep.subr.mxu0 0.0
    %1749 = vmatpush1.msra.mxu0 0.0
    %1750 = vmatprep.subr.mxu0 0.0
    %1751 = vmatpush1.msra.mxu0 0.0
    %1752 = vmatprep.subr.mxu0 0.0
    %1753 = vmatpush1.msra.mxu0 0.0
    %1754 = vmatprep.subr.mxu0 0.0
    %1755 = vmatpush1.msra.mxu0 0.0
    %1756 = vmatprep.subr.mxu0 0.0
    %1757 = vmatpush1.msra.mxu0 0.0
    %1758 = vmatprep.subr.mxu0 0.0
    %1759 = vmatpush1.msra.mxu0 0.0
    %1760 = vmatprep.subr.mxu0 0.0
    %1761 = vmatpush1.msra.mxu0 0.0
    %1762 = vmatprep.subr.mxu0 0.0
    %1763 = vmatpush1.msra.mxu0 0.0
    %1764 = vmatprep.subr.mxu0 0.0
    %1765 = vmatpush1.msra.mxu0 0.0
    %1766 = vmatprep.subr.mxu0 0.0
    %1767 = vmatpush1.msra.mxu0 0.0
    %1768 = vmatprep.subr.mxu0 0.0
    %1769 = vmatpush1.msra.mxu0 0.0
    %1770 = vmatprep.subr.mxu0 0.0
    %1771 = vmatpush1.msra.mxu0 0.0
    %1772 = vmatprep.subr.mxu0 0.0
    %1773 = vmatpush1.msra.mxu0 0.0
    %1774 = vmatprep.subr.mxu0 0.0
    %1775 = vmatpush1.msra.mxu0 0.0
    %1776 = vmatprep.subr.mxu0 0.0
    %1777 = vmatpush1.msra.mxu0 0.0
    %1778 = vmatprep.subr.mxu0 0.0
    %1779 = vmatpush1.msra.mxu0 0.0
    %1780 = vmatprep.subr.mxu0 0.0
    %1781 = vmatpush1.msra.mxu0 0.0
    %1782 = vmatprep.subr.mxu0 0.0
    %1783 = vmatpush1.msra.mxu0 0.0
    %1784 = vmatprep.subr.mxu0 0.0
    %1785 = vmatpush1.msra.mxu0 0.0
    %1786 = vmatprep.subr.mxu0 0.0
    %1787 = vmatpush1.msra.mxu0 0.0
    %1788 = vmatprep.mubr.f32.mxu0 0.0
    %1789 = vmatmul.mubr.f32.gmra.mrb[0].mxu0 %v1717
    %v1790 = vpop.f32.mrb[0].mxu0
    %v1791 = vadd.f32 0.0, %v1790
    %v1792 = vpop.f32.mrb[0].mxu0
    %1793 = vmatprep.mubr.f32.mxu0 0.0
    %1794 = vmatmul.mubr.f32.gmra.mrb[0].mxu0 %v1720
    %v1795 = vpop.f32.mrb[0].mxu0
    %v1796 = vadd.f32 0.0, %v1795
    %v1797 = vpop.f32.mrb[0].mxu0
    %1798 = vdwg.mxu0
    %1801 = vrot.lane.b32.xlu0 %v1263, 8
    %v1802 = vpop.permute.xlu0 %1801
    %1803 = vrot.lane.b32.xlu0 %v1268, 8
    %v1804 = vpop.permute.xlu0 %1803
    %1809 = vrot.lane.b32.xlu0 %v1351, 16
    %v1810 = vpop.permute.xlu0 %1809
    %1811 = vrot.lane.b32.xlu0 %v1356, 16
    %v1812 = vpop.permute.xlu0 %1811
    %1817 = vrot.lane.b32.xlu0 %v1439, 24
    %v1818 = vpop.permute.xlu0 %1817
    %1819 = vrot.lane.b32.xlu0 %v1444, 24
    %v1820 = vpop.permute.xlu0 %1819
    %v1823 = vsel %vm207, %v1175, %v1802
    %v1824 = vsel %vm207, %v1180, %v1804
    %vm1825 = vcmask 130048
    %v1826 = vsel %vm1825, %v1823, %v1810
    %v1827 = vsel %vm1825, %v1824, %v1812
    %vm1828 = vcmask 195584
    %v1829 = vsel %vm1828, %v1826, %v1818
    %v1830 = vsel %vm1828, %v1827, %v1820
    %1833 = vrot.lane.b32.xlu0 %v1615, 8
    %v1834 = vpop.permute.xlu0 %1833
    %1835 = vrot.lane.b32.xlu0 %v1620, 8
    %v1836 = vpop.permute.xlu0 %1835
    %1841 = vrot.lane.b32.xlu0 %v1703, 16
    %v1842 = vpop.permute.xlu0 %1841
    %1843 = vrot.lane.b32.xlu0 %v1708, 16
    %v1844 = vpop.permute.xlu0 %1843
    %1849 = vrot.lane.b32.xlu0 %v1791, 24
    %v1850 = vpop.permute.xlu0 %1849
    %1851 = vrot.lane.b32.xlu0 %v1796, 24
    %v1852 = vpop.permute.xlu0 %1851
    %v1855 = vsel %vm207, %v1527, %v1834
    %v1856 = vsel %vm207, %v1532, %v1836
    %v1857 = vsel %vm1825, %v1855, %v1842
    %v1858 = vsel %vm1825, %v1856, %v1844
    %v1859 = vsel %vm1828, %v1857, %v1850
    %v1860 = vsel %vm1828, %v1858, %v1852
    %v1863 = vrot.slane %v1859, 7
    %v1864 = vrot.slane %v1860, 7
    %v1865 = vsel %vm1105, %v1863, %v1864
    %v1867 = vsel %vm1105, %v1830, %v1863
    %v1869 = vlaneseq
    %v1870 = vshrl.u32 %v1869, 7
    %v1871 = vsub.s32 0, %v1870
    %v1872 = vrot.slane %v69, %v1871
    %v1875 = vsel %vm73, %v1829, 0
    %v1878 = vsel %vm73, %v1867, 0
    %v1880 = vsel %vm73, %v1865, 0
    %1882 = vmatprep.subr.mxu0 0.0
    %1883 = vmatpush1.msra.mxu0 %v65
    %1884 = vmatprep.subr.mxu0 0.0
    %1885 = vmatpush1.msra.mxu0 %v66
    %1886 = vmatprep.subr.mxu0 0.0
    %1887 = vmatpush1.msra.mxu0 %v67
    %1888 = vmatprep.subr.mxu0 0.0
    %1889 = vmatpush1.msra.mxu0 %v68
    %1890 = vmatprep.subr.mxu0 0.0
    %1891 = vmatpush1.msra.mxu0 0.0
    %1892 = vmatprep.subr.mxu0 0.0
    %1893 = vmatpush1.msra.mxu0 0.0
    %1894 = vmatprep.subr.mxu0 0.0
    %1895 = vmatpush1.msra.mxu0 0.0
    %1896 = vmatprep.subr.mxu0 0.0
    %1897 = vmatpush1.msra.mxu0 0.0
    %1898 = vmatprep.subr.mxu0 0.0
    %1899 = vmatpush1.msra.mxu0 0.0
    %1900 = vmatprep.subr.mxu0 0.0
    %1901 = vmatpush1.msra.mxu0 0.0
    %1902 = vmatprep.subr.mxu0 0.0
    %1903 = vmatpush1.msra.mxu0 0.0
    %1904 = vmatprep.subr.mxu0 0.0
    %1905 = vmatpush1.msra.mxu0 0.0
    %1906 = vmatprep.subr.mxu0 0.0
    %1907 = vmatpush1.msra.mxu0 0.0
    %1908 = vmatprep.subr.mxu0 0.0
    %1909 = vmatpush1.msra.mxu0 0.0
    %1910 = vmatprep.subr.mxu0 0.0
    %1911 = vmatpush1.msra.mxu0 0.0
    %1912 = vmatprep.subr.mxu0 0.0
    %1913 = vmatpush1.msra.mxu0 0.0
    %1914 = vmatprep.subr.mxu0 0.0
    %1915 = vmatpush1.msra.mxu0 0.0
    %1916 = vmatprep.subr.mxu0 0.0
    %1917 = vmatpush1.msra.mxu0 0.0
    %1918 = vmatprep.subr.mxu0 0.0
    %1919 = vmatpush1.msra.mxu0 0.0
    %1920 = vmatprep.subr.mxu0 0.0
    %1921 = vmatpush1.msra.mxu0 0.0
    %1922 = vmatprep.subr.mxu0 0.0
    %1923 = vmatpush1.msra.mxu0 0.0
    %1924 = vmatprep.subr.mxu0 0.0
    %1925 = vmatpush1.msra.mxu0 0.0
    %1926 = vmatprep.subr.mxu0 0.0
    %1927 = vmatpush1.msra.mxu0 0.0
    %1928 = vmatprep.subr.mxu0 0.0
    %1929 = vmatpush1.msra.mxu0 0.0
    %1930 = vmatprep.subr.mxu0 0.0
    %1931 = vmatpush1.msra.mxu0 0.0
    %1932 = vmatprep.subr.mxu0 0.0
    %1933 = vmatpush1.msra.mxu0 0.0
    %1934 = vmatprep.subr.mxu0 0.0
    %1935 = vmatpush1.msra.mxu0 0.0
    %1936 = vmatprep.subr.mxu0 0.0
    %1937 = vmatpush1.msra.mxu0 0.0
    %1938 = vmatprep.subr.mxu0 0.0
    %1939 = vmatpush1.msra.mxu0 0.0
    %1940 = vmatprep.subr.mxu0 0.0
    %1941 = vmatpush1.msra.mxu0 0.0
    %1942 = vmatprep.subr.mxu0 0.0
    %1943 = vmatpush1.msra.mxu0 0.0
    %1944 = vmatprep.subr.mxu0 0.0
    %1945 = vmatpush1.msra.mxu0 0.0
    %1946 = vmatprep.mubr.f32.mxu0 0.0
    %1947 = vmatmul.mubr.f32.gmra.mrb[0].mxu0 %v1875
    %v1948 = vpop.f32.mrb[0].mxu0
    %v1949 = vadd.f32 %v1872, %v1948
    %v1950 = vpop.f32.mrb[0].mxu0
    %1951 = vmatprep.mubr.f32.mxu0 0.0
    %1952 = vmatmul.mubr.f32.gmra.mrb[0].mxu0 %v1878
    %v1953 = vpop.f32.mrb[0].mxu0
    %v1954 = vadd.f32 %v1872, %v1953
    %v1955 = vpop.f32.mrb[0].mxu0
    %1956 = vmatprep.mubr.f32.mxu0 0.0
    %1957 = vmatmul.mubr.f32.gmra.mrb[0].mxu0 %v1880
    %v1958 = vpop.f32.mrb[0].mxu0
    %v1959 = vadd.f32 %v1872, %v1958
    %v1960 = vpop.f32.mrb[0].mxu0
    %1961 = vdwg.mxu0
    %1962 = vst.msk [vmem:[#allocation8] sm:$0xff] %vm73, %v1949
    %1963 = vst.msk [vmem:[#allocation8 + $0x8] sm:$0xff] %vm73, %v1954
    %vm1964 = vcmask 254976
    %1965 = vst.msk [vmem:[#allocation8 + $0x10] sm:$0x3] %vm1964, %v1959
    // Predicated region
    $region30: #{tpu_custom_call.1} parent=1 // pred_check
      _
    $region31: #{tpu_custom_call.1} parent=1 // pred_check_branch
      %1967 = sbr.rel (0) target = $region33
    $region32: #{tpu_custom_call.1} parent=1 // pred_region
      %s1969 = ssub.s32 384, 384
      %1970 = vsyncadd [#allocation4], %s1969
      %s1971 = sshll.u32 [#allocation8], 4
      %s1972 = int_to_ptr.vmem [resolvable:$true] %s1971
      %1977 = dma.vmem_to_hbm [thread:$0]  %s1972, 384, %s4, [#allocation4], 128, 128, 8
    $region33: #{tpu_custom_call.1} parent=1 // pred_fallthru
      _
    // Predicated region
    $region34: #{tpu_custom_call.1} parent=1 // pred_check
      _
    $region35: #{tpu_custom_call.1} parent=1 // pred_check_branch
      %1979 = sbr.rel (0) target = $region37
    $region36: #{tpu_custom_call.1} parent=1 // pred_region
      _
    $region37: #{tpu_custom_call.1} parent=1 // pred_fallthru
      _
    // Predicated region
    $region38: #{tpu_custom_call.1} parent=1 // pred_check
      _
    $region39: #{tpu_custom_call.1} parent=1 // pred_check_branch
      %1981 = sbr.rel (0) target = $region41
    $region40: #{tpu_custom_call.1} parent=1 // pred_region
      %1982 = dma.done [#allocation4], 384
    $region41: #{tpu_custom_call.1} parent=1 // pred_fallthru
      _
    // Predicated region
    $region42: #{tpu_custom_call.1} parent=1 // pred_check
      _
    $region43: #{tpu_custom_call.1} parent=1 // pred_check_branch
      %1984 = sbr.rel (0) target = $region45
    $region44: #{tpu_custom_call.1} parent=1 // pred_region
      _
    $region45: #{tpu_custom_call.1} parent=1 // pred_fallthru
      _
    %1985 = vsyncpa [#allocation3], 1
    %1986 = vsyncpa [#allocation6], 1
    %1987 = vsyncpa [#allocation4], 1

</llo_original>
